<compile_context>
chip_gen: v7x
topology: tpu7x:2x2x1
jax: 0.10.0
libtpu: 0.0.40
codegen_flags: <defaults>
</compile_context>

<pallas_src>
import jax
import jax.numpy as jnp
from jax import lax
from jax.experimental import pallas as pl
from jax.experimental.pallas import tpu as pltpu


def _round_up(v, m):
    return (v + m - 1) // m * m


def _kernel(t0, t1, t2, w_ref, b_ref, o_ref):
    # t{kh}:  (1, th*Wo_p, 3*C_pad) bf16 -- activations for kernel row kh,
    #         the three kw shifts concatenated along channels (K = 3*C_pad).
    # w_ref:  (3, 3*C_pad, tco)     bf16
    # b_ref:  (1, tco)              f32
    # o_ref:  (1, th*Wo_p, tco)     bf16
    acc = jnp.dot(t0[0], w_ref[0], preferred_element_type=jnp.float32)
    acc = acc + jnp.dot(t1[0], w_ref[1], preferred_element_type=jnp.float32)
    acc = acc + jnp.dot(t2[0], w_ref[2], preferred_element_type=jnp.float32)
    o_ref[0] = (acc + b_ref[...]).astype(o_ref.dtype)


def _vmem_capacity_bytes():
    try:
        cap = int(pltpu.get_tpu_info().vmem_capacity_bytes)
        if cap > 0:
            return cap
    except Exception:
        pass
    return 64 << 20  # conservative fallback: v7x per-TensorCore VMEM


def _pick_tiles(Ho, Wo_p, C_pad, Co_p, vmem_cap, dsz, out_dsz):
    K = 3 * C_pad
    # Output-channel tile: weight block under ~VMEM/5 (~12.8 MiB on v7x,
    # ~25.6 MiB on 128-MiB v5e/v6e) -> J == 1 for realistic channel counts.
    w_budget = max(vmem_cap // 5, 8 << 20)
    nco = Co_p // 128
    tco = 128
    for d in range(nco, 0, -1):
        if nco % d == 0 and 3 * K * (d * 128) * dsz <= w_budget:
            tco = d * 128
            break
    # Row tile: per-step working set (double-buffered in/out blocks + f32
    # accumulator temporaries) within ~55% of VMEM; GEMM M kept <= ~1024 rows.
    budget = int(vmem_cap * 0.55)
    per_row = 2 * (3 * Wo_p * K * dsz + Wo_p * tco * out_dsz) + 2 * Wo_p * tco * 4
    fixed = 2 * (3 * K * tco * dsz + tco * 4)
    th = max(1, min(Ho, (budget - fixed) // per_row, max(1, 1024 // Wo_p)))
    return int(th), int(tco)


def downsample_conv(x_nchw, weight, bias, *, compute_dtype=jnp.bfloat16,
                    out_dtype=jnp.bfloat16):
    """Equivalent of nn.Conv2d(C, C, kernel_size=3, stride=2, padding=1)(x)."""
    N, C_in, H, W = x_nchw.shape
    C_out = weight.shape[0]
    Ho = (H - 1) // 2 + 1
    Wo = (W - 1) // 2 + 1

    Wo_p = _round_up(Wo, 8)                        # sublane-aligned rows
    C_pad = _round_up(C_in, 128)                   # lane-dense GEMM K
    Co_p = _round_up(max(C_out, 128), 128)         # lane-dense GEMM N
    K = 3 * C_pad

    dsz = jnp.dtype(compute_dtype).itemsize
    out_dsz = jnp.dtype(out_dtype).itemsize
    vmem_cap = _vmem_capacity_bytes()
    th, tco = _pick_tiles(Ho, Wo_p, C_pad, Co_p, vmem_cap, dsz, out_dsz)
    J = Co_p // tco

    # Give v7x's two TensorCores at least two parallel steps when possible.
    if N == 1 and J == 1 and th >= Ho and Ho >= 2:
        th = (Ho + 1) // 2
    # Keep the bf16 block's second-minor dim 16-row aligned (sublane packing).
    if (th * Wo_p) % 16 != 0:
        th += 1

    Mt = -(-Ho // th)                  # cdiv
    Ho_p = Mt * th
    m_blk = th * Wo_p

    # ---- wrapper layout glue: NHWC pad + 3 tap gathers (kw folded into K) ---
    x = jnp.transpose(x_nchw, (0, 2, 3, 1)).astype(compute_dtype)  # NHWC bf16
    Hp = 2 * Ho_p + 1
    Wp = 2 * Wo_p + 1
    xp = jnp.pad(x, ((0, 0), (1, Hp - 1 - H), (1, Wp - 1 - W),
                     (0, C_pad - C_in)))

    def tap(kh):
        rows = xp[:, kh:kh + 2 * Ho_p:2, :, :]                      # (N,Ho_p,Wp,Cp)
        cols = [rows[:, :, kw:kw + 2 * Wo_p:2, :] for kw in range(3)]
        t = jnp.concatenate(cols, axis=-1)                          # (N,Ho_p,Wo_p,3Cp)
        return t.reshape(N, Ho_p * Wo_p, K)

    taps = [tap(kh) for kh in range(3)]

    # PyTorch weight (C_out, C_in, kh, kw) -> (3, 3*C_pad, Co_p), K = kw*C_pad+c
    wt = jnp.transpose(weight, (2, 3, 1, 0))                        # (kh,kw,Ci,Co)
    wt = jnp.pad(wt, ((0, 0), (0, 0), (0, C_pad - C_in), (0, Co_p - C_out)))
    w3 = wt.reshape(3, K, Co_p).astype(compute_dtype)
    b2 = jnp.pad(bias, (0, Co_p - C_out)).reshape(1, Co_p).astype(jnp.float32)

    # ---- grid: (batch, row tiles, channel tiles); order is traffic-driven ---
    act_bytes = 3 * N * Ho_p * Wo_p * K * dsz
    w_bytes = 3 * K * Co_p * dsz
    j_inner = True
    if J > 1:
        # j innermost -> activations stay resident, weights re-fetched N*Mt times
        # j outermost -> weight tile stays resident, activations re-fetched J times
        j_inner = (N * Mt - 1) * w_bytes <= (J - 1) * act_bytes

    if j_inner:
        grid = (N, Mt, J)
        unpack = lambda n, mt, j: (n, mt, j)
    else:
        grid = (J, N, Mt)
        unpack = lambda j, n, mt: (n, mt, j)

    def tap_map(*g):
        n, mt, _ = unpack(*g)
        return (n, mt, 0)

    def w_map(*g):
        _, _, j = unpack(*g)
        return (0, 0, j)

    def b_map(*g):
        _, _, j = unpack(*g)
        return (0, j)

    def out_map(*g):
        n, mt, j = unpack(*g)
        return (n, mt, j)

    in_specs = ([pl.BlockSpec((1, m_blk, K), tap_map)] * 3
                + [pl.BlockSpec((3, K, tco), w_map),
                   pl.BlockSpec((1, tco), b_map)])
    out_spec = pl.BlockSpec((1, m_blk, tco), out_map)

    # ---- VMEM / cost bookkeeping --------------------------------------------
    blk_bytes = (3 * m_blk * K * dsz + 3 * K * tco * dsz + tco * 4
                 + m_blk * tco * out_dsz)
    vmem_need = 2 * blk_bytes + 2 * m_blk * tco * 4
    vmem_ceiling = max(vmem_cap - (8 << 20), 32 << 20)
    vmem_limit = int(min(max(vmem_need * 5 // 4 + (2 << 20), 32 << 20),
                         vmem_ceiling))

    flops = 2 * N * Ho_p * Wo_p * 3 * K * Co_p
    out_bytes = N * Ho_p * Wo_p * Co_p * out_dsz
    if j_inner:
        bytes_accessed = act_bytes + N * Mt * w_bytes + Co_p * 4 + out_bytes
    else:
        bytes_accessed = J * act_bytes + w_bytes + Co_p * 4 + out_bytes

    out = pl.pallas_call(
        _kernel,
        out_shape=jax.ShapeDtypeStruct((N, Ho_p * Wo_p, Co_p), out_dtype),
        grid=grid,
        in_specs=in_specs,
        out_specs=out_spec,
        compiler_params=pltpu.CompilerParams(
            dimension_semantics=("parallel", "parallel", "parallel"),
            vmem_limit_bytes=vmem_limit,
        ),
        cost_estimate=pl.CostEstimate(
            flops=int(flops), transcendentals=0,
            bytes_accessed=int(bytes_accessed)),
    )(*taps, w3, b2)

    # (N, Ho_p*Wo_p, Co_p) -> NCHW, dropping row / width / channel padding.
    out = out.reshape(N, Ho_p, Wo_p, Co_p)[:, :Ho, :Wo, :C_out]
    return jnp.transpose(out, (0, 3, 1, 2)).astype(x_nchw.dtype)


if __name__ == "__main__":
    # Small deterministic example: batch=2, channels=4, spatial=16x16 (NCHW).
    N, C, H, W = 2, 4, 16, 16
    key = jax.random.PRNGKey(0)
    kx, kw_, kb = jax.random.split(key, 3)

    x = jax.random.normal(kx, (N, C, H, W), dtype=jnp.float32)

    # Deterministic PyTorch-like uniform init: U(-1/sqrt(fan_in), 1/sqrt(fan_in))
    fan_in = C * 3 * 3
    bound = 1.0 / (fan_in ** 0.5)
    weight = jax.random.uniform(kw_, (C, C, 3, 3), jnp.float32, -bound, bound)
    bias = jax.random.uniform(kb, (C,), jnp.float32, -bound, bound)

    out = downsample_conv(x, weight, bias)
    out = jax.block_until_ready(out)

    # Reference: XLA conv on the same bf16-rounded operands (the kernel uses
    # bf16 MXU inputs with f32 accumulation and a bf16 output store).
    xb = x.astype(jnp.bfloat16).astype(jnp.float32)
    wb = weight.astype(jnp.bfloat16).astype(jnp.float32)
    ref = lax.conv_general_dilated(
        xb, wb, window_strides=(2, 2), padding=((1, 1), (1, 1)),
        dimension_numbers=("NCHW", "OIHW", "NCHW"),
        precision=lax.Precision.HIGHEST,
    ) + bias[None, :, None, None]

    assert out.shape == (N, C, H // 2, W // 2), out.shape
    err = float(jnp.max(jnp.abs(out - ref)))
    assert jnp.allclose(out, ref, atol=2e-2, rtol=2e-2), err

    print("KERNEL_OK")
</pallas_src>

<mosaic_0001>
module attributes {stable_mosaic.version = 11 : i64} {
  func.func @_kernel(%arg0: i32, %arg1: i32, %arg2: i32, %arg3: memref<1x64x384xbf16, #tpu.memory_space<vmem>>, %arg4: memref<1x64x384xbf16, #tpu.memory_space<vmem>>, %arg5: memref<1x64x384xbf16, #tpu.memory_space<vmem>>, %arg6: memref<3x384x128xbf16, #tpu.memory_space<vmem>>, %arg7: memref<1x128xf32, #tpu.memory_space<vmem>>, %arg8: memref<1x64x128xbf16, #tpu.memory_space<vmem>>) attributes {dimension_semantics = [#tpu.dimension_semantics<parallel>, #tpu.dimension_semantics<parallel>, #tpu.dimension_semantics<parallel>], iteration_bounds = array<i64: 2, 1, 1>, scalar_prefetch = 0 : i64, scratch_operands = 0 : i64, tpu.core_type = #tpu.core_type<tc>, window_params = [{transform_indices = @transform_0, window_bounds = array<i64: 1, 64, 384>}, {transform_indices = @transform_1, window_bounds = array<i64: 1, 64, 384>}, {transform_indices = @transform_2, window_bounds = array<i64: 1, 64, 384>}, {transform_indices = @transform_3, window_bounds = array<i64: 3, 384, 128>}, {transform_indices = @transform_4, window_bounds = array<i64: 1, 128>}, {transform_indices = @transform_5, window_bounds = array<i64: 1, 64, 128>}]} {
    %c0 = arith.constant 0 : index
    %c0_0 = arith.constant 0 : index
    %c0_1 = arith.constant 0 : index
    %0 = vector.load %arg3[%c0, %c0_0, %c0_1] : memref<1x64x384xbf16, #tpu.memory_space<vmem>>, vector<1x64x384xbf16>
    %1 = vector.shape_cast %0 : vector<1x64x384xbf16> to vector<64x384xbf16>
    %c0_2 = arith.constant 0 : index
    %c0_3 = arith.constant 0 : index
    %c0_4 = arith.constant 0 : index
    %2 = vector.load %arg6[%c0_2, %c0_3, %c0_4] : memref<3x384x128xbf16, #tpu.memory_space<vmem>>, vector<1x384x128xbf16>
    %3 = vector.shape_cast %2 : vector<1x384x128xbf16> to vector<384x128xbf16>
    %cst = arith.constant dense<0.000000e+00> : vector<64x128xf32>
    %4 = tpu.matmul %1, %3, %cst {dimension_numbers = #tpu.dot_dimension_numbers<[1], [0], [0], [1], [0, 0, 1, 1], [], []>} : vector<64x384xbf16>, vector<384x128xbf16>, vector<64x128xf32> -> vector<64x128xf32>
    %c0_5 = arith.constant 0 : index
    %c0_6 = arith.constant 0 : index
    %c0_7 = arith.constant 0 : index
    %5 = vector.load %arg4[%c0_5, %c0_6, %c0_7] : memref<1x64x384xbf16, #tpu.memory_space<vmem>>, vector<1x64x384xbf16>
    %6 = vector.shape_cast %5 : vector<1x64x384xbf16> to vector<64x384xbf16>
    %c1 = arith.constant 1 : index
    %c0_8 = arith.constant 0 : index
    %c0_9 = arith.constant 0 : index
    %7 = vector.load %arg6[%c1, %c0_8, %c0_9] : memref<3x384x128xbf16, #tpu.memory_space<vmem>>, vector<1x384x128xbf16>
    %8 = vector.shape_cast %7 : vector<1x384x128xbf16> to vector<384x128xbf16>
    %cst_10 = arith.constant dense<0.000000e+00> : vector<64x128xf32>
    %9 = tpu.matmul %6, %8, %cst_10 {dimension_numbers = #tpu.dot_dimension_numbers<[1], [0], [0], [1], [0, 0, 1, 1], [], []>} : vector<64x384xbf16>, vector<384x128xbf16>, vector<64x128xf32> -> vector<64x128xf32>
    %10 = arith.addf %4, %9 : vector<64x128xf32>
    %c0_11 = arith.constant 0 : index
    %c0_12 = arith.constant 0 : index
    %c0_13 = arith.constant 0 : index
    %11 = vector.load %arg5[%c0_11, %c0_12, %c0_13] : memref<1x64x384xbf16, #tpu.memory_space<vmem>>, vector<1x64x384xbf16>
    %12 = vector.shape_cast %11 : vector<1x64x384xbf16> to vector<64x384xbf16>
    %c2 = arith.constant 2 : index
    %c0_14 = arith.constant 0 : index
    %c0_15 = arith.constant 0 : index
    %13 = vector.load %arg6[%c2, %c0_14, %c0_15] : memref<3x384x128xbf16, #tpu.memory_space<vmem>>, vector<1x384x128xbf16>
    %14 = vector.shape_cast %13 : vector<1x384x128xbf16> to vector<384x128xbf16>
    %cst_16 = arith.constant dense<0.000000e+00> : vector<64x128xf32>
    %15 = tpu.matmul %12, %14, %cst_16 {dimension_numbers = #tpu.dot_dimension_numbers<[1], [0], [0], [1], [0, 0, 1, 1], [], []>} : vector<64x384xbf16>, vector<384x128xbf16>, vector<64x128xf32> -> vector<64x128xf32>
    %16 = arith.addf %10, %15 : vector<64x128xf32>
    %c0_17 = arith.constant 0 : index
    %c0_18 = arith.constant 0 : index
    %17 = vector.load %arg7[%c0_17, %c0_18] : memref<1x128xf32, #tpu.memory_space<vmem>>, vector<1x128xf32>
    %18 = vector.broadcast %17 : vector<1x128xf32> to vector<64x128xf32>
    %19 = arith.addf %16, %18 : vector<64x128xf32>
    %20 = arith.truncf %19 : vector<64x128xf32> to vector<64x128xbf16>
    %c0_19 = arith.constant 0 : index
    %c0_20 = arith.constant 0 : index
    %c0_21 = arith.constant 0 : index
    %21 = vector.load %arg8[%c0_19, %c0_20, %c0_21] : memref<1x64x128xbf16, #tpu.memory_space<vmem>>, vector<1x64x128xbf16>
    %22 = vector.shape_cast %21 : vector<1x64x128xbf16> to vector<64x128xbf16>
    %23 = vector.shape_cast %20 : vector<64x128xbf16> to vector<1x64x128xbf16>
    tpu.vector_store %arg8[%c0_19, %c0_20, %c0_21], %23 {strides = array<i32>} : memref<1x64x128xbf16, #tpu.memory_space<vmem>>, vector<1x64x128xbf16>,
    return
  }
  func.func @transform_0(%arg0: i32, %arg1: i32, %arg2: i32) -> (i32, i32, i32) {
    %c0_i32 = arith.constant 0 : i32
    %c0_i32_0 = arith.constant 0 : i32
    return %arg0, %arg1, %c0_i32 : i32, i32, i32
  }
  func.func @transform_1(%arg0: i32, %arg1: i32, %arg2: i32) -> (i32, i32, i32) {
    %c0_i32 = arith.constant 0 : i32
    %c0_i32_0 = arith.constant 0 : i32
    return %arg0, %arg1, %c0_i32 : i32, i32, i32
  }
  func.func @transform_2(%arg0: i32, %arg1: i32, %arg2: i32) -> (i32, i32, i32) {
    %c0_i32 = arith.constant 0 : i32
    %c0_i32_0 = arith.constant 0 : i32
    return %arg0, %arg1, %c0_i32 : i32, i32, i32
  }
  func.func @transform_3(%arg0: i32, %arg1: i32, %arg2: i32) -> (i32, i32, i32) {
    %c0_i32 = arith.constant 0 : i32
    %c0_i32_0 = arith.constant 0 : i32
    %c0_i32_1 = arith.constant 0 : i32
    return %c0_i32, %c0_i32_0, %arg2 : i32, i32, i32
  }
  func.func @transform_4(%arg0: i32, %arg1: i32, %arg2: i32) -> (i32, i32) {
    %c0_i32 = arith.constant 0 : i32
    %c0_i32_0 = arith.constant 0 : i32
    return %c0_i32, %arg2 : i32, i32
  }
  func.func @transform_5(%arg0: i32, %arg1: i32, %arg2: i32) -> (i32, i32, i32) {
    %c0_i32 = arith.constant 0 : i32
    return %arg0, %arg1, %arg2 : i32, i32, i32
  }
}

</mosaic_0001>

<llo_original>
// kernel: tpu_custom_call.1
$region0: #{tpu_custom_call.1}
  #allocation0 [shape = 'u32[]', space=smem, size = 0x4, offset = 0x4, fixed_abs, tag = 'smem constant byte address 0x4 - core index']
  #allocation1 [shape = 'u32[144,128]{1,0:T(1,128)}', space=vmem, size = 0x12000, scoped, tag = 'internal scratch']
  %s0 = inlined_call_operand.hbm [shape: bf16[2,64,384], index: 0, kind: input, shape index: {}]
  %s1 = inlined_call_operand.hbm [shape: bf16[2,64,384], index: 1, kind: input, shape index: {}]
  %s2 = inlined_call_operand.hbm [shape: bf16[2,64,384], index: 2, kind: input, shape index: {}]
  %s3 = inlined_call_operand.hbm [shape: bf16[3,384,128], index: 3, kind: input, shape index: {}]
  %s4 = inlined_call_operand.vmem [shape: f32[1,128], index: 4, kind: input, shape index: {}]
  %s5 = inlined_call_operand.hbm [shape: bf16[2,64,128], index: 5, kind: output, shape index: {}]
  %s6 = sld [smem:[#allocation0]]
  $region69: #{tpu_custom_call.1} parent=0
    _
  %s8 = ssub.s32 1, %s6
  %s9 = scalar_select 0, %s8, %s6
  $region1: #{tpu_custom_call.1} parent=0
    #allocation2 [shape = 'u8[98304]{0}', space=vmem, size = 0x18000, scoped, tag = 'input window, operand 0']
    #allocation3 [shape = 's32[2]{0}', space=sflag, size = 0x8, scoped, tag = 'scoped memory for tpu_custom_call.1']
    #allocation4 [shape = 's32[2]{0}', space=sflag, size = 0x8, scoped, tag = 'scoped memory for tpu_custom_call.1']
    #allocation5 [shape = 'u8[98304]{0}', space=vmem, size = 0x18000, scoped, tag = 'input window, operand 1']
    #allocation6 [shape = 's32[2]{0}', space=sflag, size = 0x8, scoped, tag = 'scoped memory for tpu_custom_call.1']
    #allocation7 [shape = 'u8[98304]{0}', space=vmem, size = 0x18000, scoped, tag = 'input window, operand 2']
    #allocation8 [shape = 'u8[294912]{0}', space=vmem, size = 0x48000, scoped, tag = 'input window, operand 3, single buffered']
    #allocation9 [shape = 's32[1]{0}', space=sflag, size = 0x4, scoped, tag = 'scoped memory for tpu_custom_call.1']
    #allocation10 [shape = 'u8[32768]{0}', space=vmem, size = 0x8000, scoped, tag = 'output window, operand 0']
    %10 = vsyncpa [#allocation3], 0
    %s11 = scalar_lea.sflag [#allocation3], 1
    %12 = vsyncpa %s11, 0
    %13 = vsyncpa [#allocation6], 0
    %s14 = scalar_lea.sflag [#allocation6], 1
    %15 = vsyncpa %s14, 0
    %16 = vsyncpa [#allocation9], 0
    %17 = vsyncpa [#allocation4], 0
    %s18 = scalar_lea.sflag [#allocation4], 1
    %19 = vsyncpa %s18, 0
    loop: start=0, step=1, limit=4
    $region2: #{tpu_custom_call.1} parent=1 // loop_pre_header
      _
    $region3: #{tpu_custom_call.1} parent=1 // loop_header
      %s21 = sphi 0, %s25
      %p22 = scmp.ge.s32.totalorder %s21, 4
      %s28 = sphi 0, %s47
      %s29 = sphi 0, %s43
      %s30 = sphi 0, %s39
      %s31 = sphi 0, %s28
      %s32 = sphi 0, %s29
      %s33 = sphi 0, %s30
      %s34 = sphi 0, %s31
      %s35 = sphi 0, %s32
      %s36 = sphi 0, %s33
      %s52 = sphi 0, %s54
      %s55 = sphi 0, %s52
      %s56 = sphi 0, %s55
      %s72 = sphi 0, %s56
      %s80 = sphi 0, %s82
      %s83 = sphi 0, %s80
      %s84 = sphi 0, %s83
      %s100 = sphi 0, %s84
      %s108 = sphi 0, %s110
      %s111 = sphi 0, %s108
      %s112 = sphi 0, %s111
      %s128 = sphi 0, %s112
      %s134 = sphi 0, %s136
      %s137 = sphi 0, %s134
      %s138 = sphi 0, %s137
      %s154 = sphi 0, %s138
      %s160 = sphi 0, %s162
      %s163 = sphi 0, %s160
      %s164 = sphi 0, %s163
      %s180 = sphi 0, %s164
      %s190 = sphi 0, %s192
      %s193 = sphi 0, %s190
      %s194 = sphi 0, %s193
      %s210 = sphi 0, %s194
    $region4: #{tpu_custom_call.1} parent=1 // loop_header_branch
      %24 = sbr.rel (%p22) target = $region8
    $region5: #{tpu_custom_call.1} parent=1 // loop_body
      %s26 = ssub.s32 %s21, 1
      %s27 = ssub.s32 %s21, 2
      %s37 = sadd.s32 1, %s30
      %p38 = scmp.ge.s32.totalorder %s37, 1
      %s39 = scalar_select %p38, 0, %s37
      %s40 = sadd.s32 1, %s29
      %s41 = scalar_select %p38, %s40, %s29
      %p42 = scmp.ge.s32.totalorder %s41, 1
      %s43 = scalar_select %p42, 0, %s41
      %s44 = sadd.s32 1, %s28
      %s45 = scalar_select %p42, %s44, %s28
      %p46 = scmp.ge.s32.totalorder %s45, 2
      %s47 = scalar_select %p46, 0, %s45
      %s48 = ssub.s32 %s28, %s47
      %s49 = ssub.s32 %s29, %s43
      %s50 = sor.u32 %s48, %s49
      %p51 = scmp.eq.s32.totalorder %s50, 0
      %s53 = sadd.s32 %s52, 1
      %s54 = scalar_select %p51, %s52, %s53
      %p57 = pneg %p51
      %p58 = scmp.eq.s32.totalorder %s21, 1
      %p59 = por %p57, %p58
      %p60 = scmp.ne.s32.totalorder %s52, %s55
      %p61 = scmp.eq.s32.totalorder %s21, 0
      %p62 = por %p60, %p61
      %p63 = scmp.ne.s32.totalorder %s52, %s55
      %p64 = scmp.eq.s32.totalorder %s26, 1
      %p65 = por %p63, %p64
      %p66 = scmp.ne.s32.totalorder %s55, %s56
      %p67 = scmp.eq.s32.totalorder %s26, 0
      %p68 = por %p66, %p67
      %p69 = scmp.ne.s32.totalorder %s55, %s56
      %p70 = scmp.eq.s32.totalorder %s27, 1
      %p71 = por %p69, %p70
      %p73 = scmp.ne.s32.totalorder %s56, %s72
      %p74 = scmp.eq.s32.totalorder %s27, 0
      %p75 = por %p73, %p74
      %s76 = ssub.s32 %s28, %s47
      %s77 = ssub.s32 %s29, %s43
      %s78 = sor.u32 %s76, %s77
      %p79 = scmp.eq.s32.totalorder %s78, 0
      %s81 = sadd.s32 %s80, 1
      %s82 = scalar_select %p79, %s80, %s81
      %p85 = pneg %p79
      %p86 = scmp.eq.s32.totalorder %s21, 1
      %p87 = por %p85, %p86
      %p88 = scmp.ne.s32.totalorder %s80, %s83
      %p89 = scmp.eq.s32.totalorder %s21, 0
      %p90 = por %p88, %p89
      %p91 = scmp.ne.s32.totalorder %s80, %s83
      %p92 = scmp.eq.s32.totalorder %s26, 1
      %p93 = por %p91, %p92
      %p94 = scmp.ne.s32.totalorder %s83, %s84
      %p95 = scmp.eq.s32.totalorder %s26, 0
      %p96 = por %p94, %p95
      %p97 = scmp.ne.s32.totalorder %s83, %s84
      %p98 = scmp.eq.s32.totalorder %s27, 1
      %p99 = por %p97, %p98
      %p101 = scmp.ne.s32.totalorder %s84, %s100
      %p102 = scmp.eq.s32.totalorder %s27, 0
      %p103 = por %p101, %p102
      %s104 = ssub.s32 %s28, %s47
      %s105 = ssub.s32 %s29, %s43
      %s106 = sor.u32 %s104, %s105
      %p107 = scmp.eq.s32.totalorder %s106, 0
      %s109 = sadd.s32 %s108, 1
      %s110 = scalar_select %p107, %s108, %s109
      %p113 = pneg %p107
      %p114 = scmp.eq.s32.totalorder %s21, 1
      %p115 = por %p113, %p114
      %p116 = scmp.ne.s32.totalorder %s108, %s111
      %p117 = scmp.eq.s32.totalorder %s21, 0
      %p118 = por %p116, %p117
      %p119 = scmp.ne.s32.totalorder %s108, %s111
      %p120 = scmp.eq.s32.totalorder %s26, 1
      %p121 = por %p119, %p120
      %p122 = scmp.ne.s32.totalorder %s111, %s112
      %p123 = scmp.eq.s32.totalorder %s26, 0
      %p124 = por %p122, %p123
      %p125 = scmp.ne.s32.totalorder %s111, %s112
      %p126 = scmp.eq.s32.totalorder %s27, 1
      %p127 = por %p125, %p126
      %p129 = scmp.ne.s32.totalorder %s112, %s128
      %p130 = scmp.eq.s32.totalorder %s27, 0
      %p131 = por %p129, %p130
      %s132 = ssub.s32 %s30, %s39
      %p133 = scmp.eq.s32.totalorder %s132, 0
      %s135 = sadd.s32 %s134, 1
      %s136 = scalar_select %p133, %s134, %s135
      %p139 = pneg %p133
      %p140 = scmp.eq.s32.totalorder %s21, 1
      %p141 = por %p139, %p140
      %p142 = scmp.ne.s32.totalorder %s134, %s137
      %p143 = scmp.eq.s32.totalorder %s21, 0
      %p144 = por %p142, %p143
      %p145 = scmp.ne.s32.totalorder %s134, %s137
      %p146 = scmp.eq.s32.totalorder %s26, 1
      %p147 = por %p145, %p146
      %p148 = scmp.ne.s32.totalorder %s137, %s138
      %p149 = scmp.eq.s32.totalorder %s26, 0
      %p150 = por %p148, %p149
      %p151 = scmp.ne.s32.totalorder %s137, %s138
      %p152 = scmp.eq.s32.totalorder %s27, 1
      %p153 = por %p151, %p152
      %p155 = scmp.ne.s32.totalorder %s138, %s154
      %p156 = scmp.eq.s32.totalorder %s27, 0
      %p157 = por %p155, %p156
      %s158 = ssub.s32 %s30, %s39
      %p159 = scmp.eq.s32.totalorder %s158, 0
      %s161 = sadd.s32 %s160, 1
      %s162 = scalar_select %p159, %s160, %s161
      %p165 = pneg %p159
      %p166 = scmp.eq.s32.totalorder %s21, 1
      %p167 = por %p165, %p166
      %p168 = scmp.ne.s32.totalorder %s160, %s163
      %p169 = scmp.eq.s32.totalorder %s21, 0
      %p170 = por %p168, %p169
      %p171 = scmp.ne.s32.totalorder %s160, %s163
      %p172 = scmp.eq.s32.totalorder %s26, 1
      %p173 = por %p171, %p172
      %p174 = scmp.ne.s32.totalorder %s163, %s164
      %p175 = scmp.eq.s32.totalorder %s26, 0
      %p176 = por %p174, %p175
      %p177 = scmp.ne.s32.totalorder %s163, %s164
      %p178 = scmp.eq.s32.totalorder %s27, 1
      %p179 = por %p177, %p178
      %p181 = scmp.ne.s32.totalorder %s164, %s180
      %p182 = scmp.eq.s32.totalorder %s27, 0
      %p183 = por %p181, %p182
      %s184 = ssub.s32 %s28, %s47
      %s185 = ssub.s32 %s29, %s43
      %s186 = sor.u32 %s184, %s185
      %s187 = ssub.s32 %s30, %s39
      %s188 = sor.u32 %s186, %s187
      %p189 = scmp.eq.s32.totalorder %s188, 0
      %s191 = sadd.s32 %s190, 1
      %s192 = scalar_select %p189, %s190, %s191
      %p195 = pneg %p189
      %p196 = scmp.eq.s32.totalorder %s21, 1
      %p197 = por %p195, %p196
      %p198 = scmp.ne.s32.totalorder %s190, %s193
      %p199 = scmp.eq.s32.totalorder %s21, 0
      %p200 = por %p198, %p199
      %p201 = scmp.ne.s32.totalorder %s190, %s193
      %p202 = scmp.eq.s32.totalorder %s26, 1
      %p203 = por %p201, %p202
      %p204 = scmp.ne.s32.totalorder %s193, %s194
      %p205 = scmp.eq.s32.totalorder %s26, 0
      %p206 = por %p204, %p205
      %p207 = scmp.ne.s32.totalorder %s193, %s194
      %p208 = scmp.eq.s32.totalorder %s27, 1
      %p209 = por %p207, %p208
      %p211 = scmp.ne.s32.totalorder %s194, %s210
      %p212 = scmp.eq.s32.totalorder %s27, 0
      %p213 = por %p211, %p212
      %p214 = scmp.le.s32.totalorder 1, %s21
      %p215 = scmp.lt.s32.totalorder %s21, 3
      %p216 = pnand %p214, %p215
      %p217 = pneg %p216
      // Predicated region
      $region9: #{tpu_custom_call.1} parent=5 // pred_check
        _
      $region10: #{tpu_custom_call.1} parent=5 // pred_check_branch
        %219 = sbr.rel (%p216) target = $region12
      $region11: #{tpu_custom_call.1} parent=5 // pred_region
        %s220 = ssub.s32 %s21, 1
        // Predicated region
        $region13: #{tpu_custom_call.1} parent=11 // pred_check
          %p221 = pneg %p150
        $region14: #{tpu_custom_call.1} parent=11 // pred_check_branch
          %223 = sbr.rel (%p221) target = $region16
        $region15: #{tpu_custom_call.1} parent=11 // pred_region
          %s225 = ssub.s32 9216, 9216
          %226 = vsyncadd [#allocation9], %s225
          %s227 = smul.addr %s33, 64
          %s228 = scalar_lea.hbm %s3, %s227
          %s229 = sshll.u32 [#allocation8], 4
          %s230 = int_to_ptr.vmem [resolvable:$true] %s229
          %235 = dma.hbm_to_vmem [thread:$0]  %s228, 9216, %s230, [#allocation9], 64, 64, 4
        $region16: #{tpu_custom_call.1} parent=11 // pred_fallthru
          _
        // Predicated region
        $region17: #{tpu_custom_call.1} parent=11 // pred_check
          %p236 = pneg %p176
        $region18: #{tpu_custom_call.1} parent=11 // pred_check_branch
          %238 = sbr.rel (%p236) target = $region20
        $region19: #{tpu_custom_call.1} parent=11 // pred_region
          %p239 = scmp.lt.s32.totalorder %s33, 0
          %s240 = scalar_select %p239, %s33, 0
          %s241 = scalar_lea.vmem %s4, %s240
        $region20: #{tpu_custom_call.1} parent=11 // pred_fallthru
          _
      $region12: #{tpu_custom_call.1} parent=5 // pred_fallthru
        _
      %p242 = scmp.lt.s32.totalorder %s21, 2
      // Predicated region
      $region21: #{tpu_custom_call.1} parent=5 // pred_check
        %p243 = pneg %p242
      $region22: #{tpu_custom_call.1} parent=5 // pred_check_branch
        %245 = sbr.rel (%p243) target = $region24
      $region23: #{tpu_custom_call.1} parent=5 // pred_region
        // Predicated region
        $region25: #{tpu_custom_call.1} parent=23 // pred_check
          %p246 = pneg %p62
        $region26: #{tpu_custom_call.1} parent=23 // pred_check_branch
          %248 = sbr.rel (%p246) target = $region28
        $region27: #{tpu_custom_call.1} parent=23 // pred_region
          %s249 = sand.u32 %s52, 1
          %s250 = scalar_lea.sflag [#allocation3], %s249
          %s251 = sand.u32 %s52, 1
          %s252 = smul.addr %s251, 96
          %s253 = scalar_lea.vmem [#allocation2], %s252
          %s254 = smul.u32 8, %s29
          %s256 = ssub.s32 1536, 1536
          %257 = vsyncadd %s250, %s256
          %s258 = smul.addr %s254, 3
          %s259 = smul.addr %s28, 24
          %s260 = sadd.s32 %s258, %s259
          %s261 = smul.addr %s260, 64
          %s262 = scalar_lea.hbm %s0, %s261
          %s263 = sshll.u32 %s253, 4
          %s264 = int_to_ptr.vmem [resolvable:$true] %s263
          %269 = dma.hbm_to_vmem [thread:$0]  %s262, 1536, %s264, %s250, 192, 192, 12
        $region28: #{tpu_custom_call.1} parent=23 // pred_fallthru
          _
        // Predicated region
        $region29: #{tpu_custom_call.1} parent=23 // pred_check
          %p270 = pneg %p90
        $region30: #{tpu_custom_call.1} parent=23 // pred_check_branch
          %272 = sbr.rel (%p270) target = $region32
        $region31: #{tpu_custom_call.1} parent=23 // pred_region
          %s273 = sand.u32 %s21, 1
          %s274 = scalar_lea.sflag [#allocation6], %s273
          %s275 = sand.u32 %s80, 1
          %s276 = smul.addr %s275, 96
          %s277 = scalar_lea.vmem [#allocation5], %s276
          %s278 = smul.u32 8, %s29
          %s280 = ssub.s32 1536, 1536
          %281 = vsyncadd %s274, %s280
          %s282 = smul.addr %s278, 3
          %s283 = smul.addr %s28, 24
          %s284 = sadd.s32 %s282, %s283
          %s285 = smul.addr %s284, 64
          %s286 = scalar_lea.hbm %s1, %s285
          %s287 = sshll.u32 %s277, 4
          %s288 = int_to_ptr.vmem [resolvable:$true] %s287
          %293 = dma.hbm_to_vmem [thread:$0]  %s286, 1536, %s288, %s274, 192, 192, 12
        $region32: #{tpu_custom_call.1} parent=23 // pred_fallthru
          _
        // Predicated region
        $region33: #{tpu_custom_call.1} parent=23 // pred_check
          %p294 = pneg %p118
        $region34: #{tpu_custom_call.1} parent=23 // pred_check_branch
          %296 = sbr.rel (%p294) target = $region36
        $region35: #{tpu_custom_call.1} parent=23 // pred_region
          %s297 = sand.u32 %s21, 1
          %s298 = scalar_lea.sflag [#allocation6], %s297
          %s299 = sand.u32 %s108, 1
          %s300 = smul.addr %s299, 96
          %s301 = scalar_lea.vmem [#allocation7], %s300
          %s302 = smul.u32 8, %s29
          %s304 = ssub.s32 1536, 1536
          %305 = vsyncadd %s298, %s304
          %s306 = smul.addr %s302, 3
          %s307 = smul.addr %s28, 24
          %s308 = sadd.s32 %s306, %s307
          %s309 = smul.addr %s308, 64
          %s310 = scalar_lea.hbm %s2, %s309
          %s311 = sshll.u32 %s301, 4
          %s312 = int_to_ptr.vmem [resolvable:$true] %s311
          %317 = dma.hbm_to_vmem [thread:$0]  %s310, 1536, %s312, %s298, 192, 192, 12
        $region36: #{tpu_custom_call.1} parent=23 // pred_fallthru
          _
      $region24: #{tpu_custom_call.1} parent=5 // pred_fallthru
        _
      %p318 = scmp.le.s32.totalorder 1, %s21
      %p319 = scmp.lt.s32.totalorder %s21, 3
      %p320 = pnand %p318, %p319
      %p321 = pneg %p320
      // Predicated region
      $region37: #{tpu_custom_call.1} parent=5 // pred_check
        _
      $region38: #{tpu_custom_call.1} parent=5 // pred_check_branch
        %323 = sbr.rel (%p320) target = $region40
      $region39: #{tpu_custom_call.1} parent=5 // pred_region
        %s324 = ssub.s32 %s21, 1
        %s325 = sand.u32 %s55, 1
        %s326 = scalar_lea.sflag [#allocation3], %s325
        %s327 = sand.u32 %s55, 1
        %s328 = smul.addr %s327, 96
        %s329 = scalar_lea.vmem [#allocation2], %s328
        // Predicated region
        $region41: #{tpu_custom_call.1} parent=39 // pred_check
          %p330 = pneg %p68
        $region42: #{tpu_custom_call.1} parent=39 // pred_check_branch
          %332 = sbr.rel (%p330) target = $region44
        $region43: #{tpu_custom_call.1} parent=39 // pred_region
          %333 = dma.done %s326, 1536
        $region44: #{tpu_custom_call.1} parent=39 // pred_fallthru
          _
        %s334 = sand.u32 %s26, 1
        %s335 = scalar_lea.sflag [#allocation6], %s334
        %s336 = sand.u32 %s83, 1
        %s337 = smul.addr %s336, 96
        %s338 = scalar_lea.vmem [#allocation5], %s337
        // Predicated region
        $region45: #{tpu_custom_call.1} parent=39 // pred_check
          %p339 = pneg %p96
        $region46: #{tpu_custom_call.1} parent=39 // pred_check_branch
          %341 = sbr.rel (%p339) target = $region48
        $region47: #{tpu_custom_call.1} parent=39 // pred_region
          %342 = dma.done %s335, 1536
        $region48: #{tpu_custom_call.1} parent=39 // pred_fallthru
          _
        %s343 = sand.u32 %s26, 1
        %s344 = scalar_lea.sflag [#allocation6], %s343
        %s345 = sand.u32 %s111, 1
        %s346 = smul.addr %s345, 96
        %s347 = scalar_lea.vmem [#allocation7], %s346
        // Predicated region
        $region49: #{tpu_custom_call.1} parent=39 // pred_check
          %p348 = pneg %p124
        $region50: #{tpu_custom_call.1} parent=39 // pred_check_branch
          %350 = sbr.rel (%p348) target = $region52
        $region51: #{tpu_custom_call.1} parent=39 // pred_region
          %351 = dma.done %s344, 1536
        $region52: #{tpu_custom_call.1} parent=39 // pred_fallthru
          _
        // Predicated region
        $region53: #{tpu_custom_call.1} parent=39 // pred_check
          %p352 = pneg %p150
        $region54: #{tpu_custom_call.1} parent=39 // pred_check_branch
          %354 = sbr.rel (%p352) target = $region56
        $region55: #{tpu_custom_call.1} parent=39 // pred_region
          %355 = dma.done [#allocation9], 9216
        $region56: #{tpu_custom_call.1} parent=39 // pred_fallthru
          _
        %s356 = sand.u32 %s55, 1
        %s357 = scalar_lea.sflag [#allocation3], %s356
        %s358 = sand.u32 %s55, 1
        %s359 = smul.addr %s358, 96
        %s360 = scalar_lea.vmem [#allocation2], %s359
        %p361 = pneg %p68
        %p362 = pneg %p65
        %s363 = sand.u32 %s26, 1
        %s364 = scalar_lea.sflag [#allocation6], %s363
        %s365 = sand.u32 %s83, 1
        %s366 = smul.addr %s365, 96
        %s367 = scalar_lea.vmem [#allocation5], %s366
        %p368 = pneg %p96
        %p369 = pneg %p93
        %s370 = sand.u32 %s26, 1
        %s371 = scalar_lea.sflag [#allocation6], %s370
        %s372 = sand.u32 %s111, 1
        %s373 = smul.addr %s372, 96
        %s374 = scalar_lea.vmem [#allocation7], %s373
        %p375 = pneg %p124
        %p376 = pneg %p121
        %p377 = pneg %p150
        %p378 = pneg %p147
        %p379 = scmp.lt.s32.totalorder %s33, 0
        %s380 = scalar_select %p379, %s33, 0
        %s381 = scalar_lea.vmem %s4, %s380
        %p382 = pneg %p176
        %p383 = pneg %p173
        %p384 = pneg %p206
        %p385 = pneg %p203
        %s386 = sand.u32 %s193, 1
        %s387 = scalar_lea.sflag [#allocation4], %s386
        %s388 = sand.u32 %s193, 1
        %s389 = smul.addr %s388, 32
        %s390 = scalar_lea.vmem [#allocation10], %s389
        %s391 = smul.u32 8, %s32
        %s392 = smul.u32 8, %s32
        %s393 = smul.u32 8, %s32
        %p394 = scmp.lt.s32.totalorder %s33, 0
        %s395 = scalar_select %p394, %s33, 0
        %s396 = scalar_lea.vmem %s4, %s395
        %s397 = smul.u32 8, %s32
        %v399 = vld [vmem:[%s329] sm:$0xff]
        %v400 = vld [vmem:[%s329 + $0x8] sm:$0xf]
        %v401 = vld [vmem:[%s329 + $0xc] sm:$0xff]
        %v402 = vld [vmem:[%s329 + $0x14] sm:$0xf]
        %v403 = vld [vmem:[%s329 + $0x18] sm:$0xff]
        %v404 = vld [vmem:[%s329 + $0x20] sm:$0xf]
        %v405 = vld [vmem:[%s329 + $0x24] sm:$0xff]
        %v406 = vld [vmem:[%s329 + $0x2c] sm:$0xf]
        %v407 = vld [vmem:[%s329 + $0x30] sm:$0xff]
        %v408 = vld [vmem:[%s329 + $0x38] sm:$0xf]
        %v409 = vld [vmem:[%s329 + $0x3c] sm:$0xff]
        %v410 = vld [vmem:[%s329 + $0x44] sm:$0xf]
        %v411 = vld [vmem:[%s329 + $0x48] sm:$0xff]
        %v412 = vld [vmem:[%s329 + $0x50] sm:$0xf]
        %v413 = vld [vmem:[%s329 + $0x54] sm:$0xff]
        %v414 = vld [vmem:[%s329 + $0x5c] sm:$0xf]
        %v415 = vld [vmem:[#allocation8] sm:$0xf]
        %v416 = vld [vmem:[#allocation8 + $0x4] sm:$0xf]
        %v417 = vld [vmem:[#allocation8 + $0x8] sm:$0xf]
        %v418 = vld [vmem:[#allocation8 + $0xc] sm:$0xf]
        %v419 = vld [vmem:[#allocation8 + $0x10] sm:$0xf]
        %v420 = vld [vmem:[#allocation8 + $0x14] sm:$0xf]
        %v421 = vld [vmem:[#allocation8 + $0x18] sm:$0xf]
        %v422 = vld [vmem:[#allocation8 + $0x1c] sm:$0xf]
        %v423 = vld [vmem:[#allocation8 + $0x20] sm:$0xf]
        %v424 = vld [vmem:[#allocation8 + $0x24] sm:$0xf]
        %v425 = vld [vmem:[#allocation8 + $0x28] sm:$0xf]
        %v426 = vld [vmem:[#allocation8 + $0x2c] sm:$0xf]
        %v427 = vld [vmem:[#allocation8 + $0x30] sm:$0xf]
        %v428 = vld [vmem:[#allocation8 + $0x34] sm:$0xf]
        %v429 = vld [vmem:[#allocation8 + $0x38] sm:$0xf]
        %v430 = vld [vmem:[#allocation8 + $0x3c] sm:$0xf]
        %v431 = vld [vmem:[#allocation8 + $0x40] sm:$0xf]
        %v432 = vld [vmem:[#allocation8 + $0x44] sm:$0xf]
        %v433 = vld [vmem:[#allocation8 + $0x48] sm:$0xf]
        %v434 = vld [vmem:[#allocation8 + $0x4c] sm:$0xf]
        %v435 = vld [vmem:[#allocation8 + $0x50] sm:$0xf]
        %v436 = vld [vmem:[#allocation8 + $0x54] sm:$0xf]
        %v437 = vld [vmem:[#allocation8 + $0x58] sm:$0xf]
        %v438 = vld [vmem:[#allocation8 + $0x5c] sm:$0xf]
        %v439 = vld [vmem:[#allocation8 + $0x60] sm:$0xf]
        %v440 = vld [vmem:[#allocation8 + $0x64] sm:$0xf]
        %v441 = vld [vmem:[#allocation8 + $0x68] sm:$0xf]
        %v442 = vld [vmem:[#allocation8 + $0x6c] sm:$0xf]
        %v443 = vld [vmem:[#allocation8 + $0x70] sm:$0xf]
        %v444 = vld [vmem:[#allocation8 + $0x74] sm:$0xf]
        %v445 = vld [vmem:[#allocation8 + $0x78] sm:$0xf]
        %v446 = vld [vmem:[#allocation8 + $0x7c] sm:$0xf]
        %v447 = vld [vmem:[#allocation8 + $0x80] sm:$0xf]
        %v448 = vld [vmem:[#allocation8 + $0x84] sm:$0xf]
        %v449 = vld [vmem:[#allocation8 + $0x88] sm:$0xf]
        %v450 = vld [vmem:[#allocation8 + $0x8c] sm:$0xf]
        %v451 = vld [vmem:[#allocation8 + $0x90] sm:$0xf]
        %v452 = vld [vmem:[#allocation8 + $0x94] sm:$0xf]
        %v453 = vld [vmem:[#allocation8 + $0x98] sm:$0xf]
        %v454 = vld [vmem:[#allocation8 + $0x9c] sm:$0xf]
        %v455 = vld [vmem:[#allocation8 + $0xa0] sm:$0xf]
        %v456 = vld [vmem:[#allocation8 + $0xa4] sm:$0xf]
        %v457 = vld [vmem:[#allocation8 + $0xa8] sm:$0xf]
        %v458 = vld [vmem:[#allocation8 + $0xac] sm:$0xf]
        %v459 = vld [vmem:[#allocation8 + $0xb0] sm:$0xf]
        %v460 = vld [vmem:[#allocation8 + $0xb4] sm:$0xf]
        %v461 = vld [vmem:[#allocation8 + $0xb8] sm:$0xf]
        %v462 = vld [vmem:[#allocation8 + $0xbc] sm:$0xf]
        %v463 = vld [vmem:[%s338] sm:$0xff]
        %v464 = vld [vmem:[%s338 + $0x8] sm:$0xf]
        %v465 = vld [vmem:[%s338 + $0xc] sm:$0xff]
        %v466 = vld [vmem:[%s338 + $0x14] sm:$0xf]
        %v467 = vld [vmem:[%s338 + $0x18] sm:$0xff]
        %v468 = vld [vmem:[%s338 + $0x20] sm:$0xf]
        %v469 = vld [vmem:[%s338 + $0x24] sm:$0xff]
        %v470 = vld [vmem:[%s338 + $0x2c] sm:$0xf]
        %v471 = vld [vmem:[%s338 + $0x30] sm:$0xff]
        %v472 = vld [vmem:[%s338 + $0x38] sm:$0xf]
        %v473 = vld [vmem:[%s338 + $0x3c] sm:$0xff]
        %v474 = vld [vmem:[%s338 + $0x44] sm:$0xf]
        %v475 = vld [vmem:[%s338 + $0x48] sm:$0xff]
        %v476 = vld [vmem:[%s338 + $0x50] sm:$0xf]
        %v477 = vld [vmem:[%s338 + $0x54] sm:$0xff]
        %v478 = vld [vmem:[%s338 + $0x5c] sm:$0xf]
        %s479 = scalar_lea.vmem [#allocation8], 192
        %v480 = vld [vmem:[%s479] sm:$0xf]
        %v481 = vld [vmem:[%s479 + $0x4] sm:$0xf]
        %v482 = vld [vmem:[%s479 + $0x8] sm:$0xf]
        %v483 = vld [vmem:[%s479 + $0xc] sm:$0xf]
        %v484 = vld [vmem:[%s479 + $0x10] sm:$0xf]
        %v485 = vld [vmem:[%s479 + $0x14] sm:$0xf]
        %v486 = vld [vmem:[%s479 + $0x18] sm:$0xf]
        %v487 = vld [vmem:[%s479 + $0x1c] sm:$0xf]
        %v488 = vld [vmem:[%s479 + $0x20] sm:$0xf]
        %v489 = vld [vmem:[%s479 + $0x24] sm:$0xf]
        %v490 = vld [vmem:[%s479 + $0x28] sm:$0xf]
        %v491 = vld [vmem:[%s479 + $0x2c] sm:$0xf]
        %v492 = vld [vmem:[%s479 + $0x30] sm:$0xf]
        %v493 = vld [vmem:[%s479 + $0x34] sm:$0xf]
        %v494 = vld [vmem:[%s479 + $0x38] sm:$0xf]
        %v495 = vld [vmem:[%s479 + $0x3c] sm:$0xf]
        %v496 = vld [vmem:[%s479 + $0x40] sm:$0xf]
        %v497 = vld [vmem:[%s479 + $0x44] sm:$0xf]
        %v498 = vld [vmem:[%s479 + $0x48] sm:$0xf]
        %v499 = vld [vmem:[%s479 + $0x4c] sm:$0xf]
        %v500 = vld [vmem:[%s479 + $0x50] sm:$0xf]
        %v501 = vld [vmem:[%s479 + $0x54] sm:$0xf]
        %v502 = vld [vmem:[%s479 + $0x58] sm:$0xf]
        %v503 = vld [vmem:[%s479 + $0x5c] sm:$0xf]
        %v504 = vld [vmem:[%s479 + $0x60] sm:$0xf]
        %v505 = vld [vmem:[%s479 + $0x64] sm:$0xf]
        %v506 = vld [vmem:[%s479 + $0x68] sm:$0xf]
        %v507 = vld [vmem:[%s479 + $0x6c] sm:$0xf]
        %v508 = vld [vmem:[%s479 + $0x70] sm:$0xf]
        %v509 = vld [vmem:[%s479 + $0x74] sm:$0xf]
        %v510 = vld [vmem:[%s479 + $0x78] sm:$0xf]
        %v511 = vld [vmem:[%s479 + $0x7c] sm:$0xf]
        %v512 = vld [vmem:[%s479 + $0x80] sm:$0xf]
        %v513 = vld [vmem:[%s479 + $0x84] sm:$0xf]
        %v514 = vld [vmem:[%s479 + $0x88] sm:$0xf]
        %v515 = vld [vmem:[%s479 + $0x8c] sm:$0xf]
        %v516 = vld [vmem:[%s479 + $0x90] sm:$0xf]
        %v517 = vld [vmem:[%s479 + $0x94] sm:$0xf]
        %v518 = vld [vmem:[%s479 + $0x98] sm:$0xf]
        %v519 = vld [vmem:[%s479 + $0x9c] sm:$0xf]
        %v520 = vld [vmem:[%s479 + $0xa0] sm:$0xf]
        %v521 = vld [vmem:[%s479 + $0xa4] sm:$0xf]
        %v522 = vld [vmem:[%s479 + $0xa8] sm:$0xf]
        %v523 = vld [vmem:[%s479 + $0xac] sm:$0xf]
        %v524 = vld [vmem:[%s479 + $0xb0] sm:$0xf]
        %v525 = vld [vmem:[%s479 + $0xb4] sm:$0xf]
        %v526 = vld [vmem:[%s479 + $0xb8] sm:$0xf]
        %v527 = vld [vmem:[%s479 + $0xbc] sm:$0xf]
        %v544 = vunpack.c.l.b16 %v463
        %v545 = vunpack.c.h.b16 %v463
        %v546 = vunpack.c.l.b16 %v464
        %v547 = vunpack.c.l.b16 %v465
        %v548 = vunpack.c.h.b16 %v465
        %v549 = vunpack.c.l.b16 %v466
        %v550 = vunpack.c.l.b16 %v467
        %v551 = vunpack.c.h.b16 %v467
        %v552 = vunpack.c.l.b16 %v468
        %v553 = vunpack.c.l.b16 %v469
        %v554 = vunpack.c.h.b16 %v469
        %v555 = vunpack.c.l.b16 %v470
        %v556 = vunpack.c.l.b16 %v471
        %v557 = vunpack.c.h.b16 %v471
        %v558 = vunpack.c.l.b16 %v472
        %v559 = vunpack.c.l.b16 %v473
        %v560 = vunpack.c.h.b16 %v473
        %v561 = vunpack.c.l.b16 %v474
        %v562 = vunpack.c.l.b16 %v475
        %v563 = vunpack.c.h.b16 %v475
        %v564 = vunpack.c.l.b16 %v476
        %v565 = vunpack.c.l.b16 %v477
        %v566 = vunpack.c.h.b16 %v477
        %v567 = vunpack.c.l.b16 %v478
        %v568 = vpack.c.b16 %v547, %v544
        %v569 = vpack.c.b16 %v548, %v545
        %v570 = vpack.c.b16 %v549, %v546
        %v571 = vpack.c.b16 %v553, %v550
        %v572 = vpack.c.b16 %v554, %v551
        %v573 = vpack.c.b16 %v555, %v552
        %v574 = vpack.c.b16 %v559, %v556
        %v575 = vpack.c.b16 %v560, %v557
        %v576 = vpack.c.b16 %v561, %v558
        %v577 = vpack.c.b16 %v565, %v562
        %v578 = vpack.c.b16 %v566, %v563
        %v579 = vpack.c.b16 %v567, %v564
        %v640 = vunpack.c.l.b16 %v480
        %v641 = vunpack.c.l.b16 %v481
        %v642 = vunpack.c.l.b16 %v482
        %v643 = vunpack.c.l.b16 %v483
        %v644 = vunpack.c.l.b16 %v484
        %v645 = vunpack.c.l.b16 %v485
        %v646 = vunpack.c.l.b16 %v486
        %v647 = vunpack.c.l.b16 %v487
        %v648 = vunpack.c.l.b16 %v488
        %v649 = vunpack.c.l.b16 %v489
        %v650 = vunpack.c.l.b16 %v490
        %v651 = vunpack.c.l.b16 %v491
        %v652 = vunpack.c.l.b16 %v492
        %v653 = vunpack.c.l.b16 %v493
        %v654 = vunpack.c.l.b16 %v494
        %v655 = vunpack.c.l.b16 %v495
        %v656 = vunpack.c.l.b16 %v496
        %v657 = vunpack.c.l.b16 %v497
        %v658 = vunpack.c.l.b16 %v498
        %v659 = vunpack.c.l.b16 %v499
        %v660 = vunpack.c.l.b16 %v500
        %v661 = vunpack.c.l.b16 %v501
        %v662 = vunpack.c.l.b16 %v502
        %v663 = vunpack.c.l.b16 %v503
        %v664 = vunpack.c.l.b16 %v504
        %v665 = vunpack.c.l.b16 %v505
        %v666 = vunpack.c.l.b16 %v506
        %v667 = vunpack.c.l.b16 %v507
        %v668 = vunpack.c.l.b16 %v508
        %v669 = vunpack.c.l.b16 %v509
        %v670 = vunpack.c.l.b16 %v510
        %v671 = vunpack.c.l.b16 %v511
        %v672 = vunpack.c.l.b16 %v512
        %v673 = vunpack.c.l.b16 %v513
        %v674 = vunpack.c.l.b16 %v514
        %v675 = vunpack.c.l.b16 %v515
        %v676 = vunpack.c.l.b16 %v516
        %v677 = vunpack.c.l.b16 %v517
        %v678 = vunpack.c.l.b16 %v518
        %v679 = vunpack.c.l.b16 %v519
        %v680 = vunpack.c.l.b16 %v520
        %v681 = vunpack.c.l.b16 %v521
        %v682 = vunpack.c.l.b16 %v522
        %v683 = vunpack.c.l.b16 %v523
        %v684 = vunpack.c.l.b16 %v524
        %v685 = vunpack.c.l.b16 %v525
        %v686 = vunpack.c.l.b16 %v526
        %v687 = vunpack.c.l.b16 %v527
        %v688 = vpack.c.b16 %v641, %v640
        %v689 = vpack.c.b16 %v643, %v642
        %v690 = vpack.c.b16 %v645, %v644
        %v691 = vpack.c.b16 %v647, %v646
        %v692 = vpack.c.b16 %v649, %v648
        %v693 = vpack.c.b16 %v651, %v650
        %v694 = vpack.c.b16 %v653, %v652
        %v695 = vpack.c.b16 %v655, %v654
        %v696 = vpack.c.b16 %v657, %v656
        %v697 = vpack.c.b16 %v659, %v658
        %v698 = vpack.c.b16 %v661, %v660
        %v699 = vpack.c.b16 %v663, %v662
        %v700 = vpack.c.b16 %v665, %v664
        %v701 = vpack.c.b16 %v667, %v666
        %v702 = vpack.c.b16 %v669, %v668
        %v703 = vpack.c.b16 %v671, %v670
        %v704 = vpack.c.b16 %v673, %v672
        %v705 = vpack.c.b16 %v675, %v674
        %v706 = vpack.c.b16 %v677, %v676
        %v707 = vpack.c.b16 %v679, %v678
        %v708 = vpack.c.b16 %v681, %v680
        %v709 = vpack.c.b16 %v683, %v682
        %v710 = vpack.c.b16 %v685, %v684
        %v711 = vpack.c.b16 %v687, %v686
        %736 = vmatprep.subr.bf16.mxu0 0
        %737 = vmatpush1.bf16.msra.mxu0 %v688
        %738 = vmatprep.subr.bf16.mxu0 0
        %739 = vmatpush1.bf16.msra.mxu0 %v689
        %740 = vmatprep.subr.bf16.mxu0 0
        %741 = vmatpush1.bf16.msra.mxu0 %v690
        %742 = vmatprep.subr.bf16.mxu0 0
        %743 = vmatpush1.bf16.msra.mxu0 %v691
        %744 = vmatprep.subr.bf16.mxu0 0
        %745 = vmatpush1.bf16.msra.mxu0 %v692
        %746 = vmatprep.subr.bf16.mxu0 0
        %747 = vmatpush1.bf16.msra.mxu0 %v693
        %748 = vmatprep.subr.bf16.mxu0 0
        %749 = vmatpush1.bf16.msra.mxu0 %v694
        %750 = vmatprep.subr.bf16.mxu0 0
        %751 = vmatpush1.bf16.msra.mxu0 %v695
        %752 = vmatprep.subr.bf16.mxu0 0
        %753 = vmatpush1.bf16.msra.mxu0 %v696
        %754 = vmatprep.subr.bf16.mxu0 0
        %755 = vmatpush1.bf16.msra.mxu0 %v697
        %756 = vmatprep.subr.bf16.mxu0 0
        %757 = vmatpush1.bf16.msra.mxu0 %v698
        %758 = vmatprep.subr.bf16.mxu0 0
        %759 = vmatpush1.bf16.msra.mxu0 %v699
        %760 = vmatprep.subr.bf16.mxu0 0
        %761 = vmatpush1.bf16.msra.mxu0 %v700
        %762 = vmatprep.subr.bf16.mxu0 0
        %763 = vmatpush1.bf16.msra.mxu0 %v701
        %764 = vmatprep.subr.bf16.mxu0 0
        %765 = vmatpush1.bf16.msra.mxu0 %v702
        %766 = vmatprep.subr.bf16.mxu0 0
        %767 = vmatpush1.bf16.msra.mxu0 %v703
        %768 = vmatprep.mubr.bf16.mxu0 %v569
        %769 = vmatmul.mubr.bf16.gmra.mrb[0].mxu0 %v568
        %v770 = vpop.f32.mrb[0].mxu0
        %v771 = vadd.f32 0.0, %v770
        %v772 = vpop.f32.mrb[0].mxu0
        %v773 = vpop.f32.mrb[0].mxu0
        %v774 = vadd.f32 0.0, %v773
        %v775 = vpop.f32.mrb[0].mxu0
        %776 = vmatprep.mubr.bf16.mxu0 %v572
        %777 = vmatmul.mubr.bf16.gmra.mrb[0].mxu0 %v571
        %v778 = vpop.f32.mrb[0].mxu0
        %v779 = vadd.f32 0.0, %v778
        %v780 = vpop.f32.mrb[0].mxu0
        %v781 = vpop.f32.mrb[0].mxu0
        %v782 = vadd.f32 0.0, %v781
        %v783 = vpop.f32.mrb[0].mxu0
        %784 = vmatprep.mubr.bf16.mxu0 %v575
        %785 = vmatmul.mubr.bf16.gmra.mrb[0].mxu0 %v574
        %v786 = vpop.f32.mrb[0].mxu0
        %v787 = vadd.f32 0.0, %v786
        %v788 = vpop.f32.mrb[0].mxu0
        %v789 = vpop.f32.mrb[0].mxu0
        %v790 = vadd.f32 0.0, %v789
        %v791 = vpop.f32.mrb[0].mxu0
        %792 = vmatprep.mubr.bf16.mxu0 %v578
        %793 = vmatmul.mubr.bf16.gmra.mrb[0].mxu0 %v577
        %v794 = vpop.f32.mrb[0].mxu0
        %v795 = vadd.f32 0.0, %v794
        %v796 = vpop.f32.mrb[0].mxu0
        %v797 = vpop.f32.mrb[0].mxu0
        %v798 = vadd.f32 0.0, %v797
        %v799 = vpop.f32.mrb[0].mxu0
        %800 = vdwg.mxu0
        %801 = vmatprep.subr.bf16.mxu0 0
        %802 = vmatpush1.bf16.msra.mxu0 %v704
        %803 = vmatprep.subr.bf16.mxu0 0
        %804 = vmatpush1.bf16.msra.mxu0 %v705
        %805 = vmatprep.subr.bf16.mxu0 0
        %806 = vmatpush1.bf16.msra.mxu0 %v706
        %807 = vmatprep.subr.bf16.mxu0 0
        %808 = vmatpush1.bf16.msra.mxu0 %v707
        %809 = vmatprep.subr.bf16.mxu0 0
        %810 = vmatpush1.bf16.msra.mxu0 %v708
        %811 = vmatprep.subr.bf16.mxu0 0
        %812 = vmatpush1.bf16.msra.mxu0 %v709
        %813 = vmatprep.subr.bf16.mxu0 0
        %814 = vmatpush1.bf16.msra.mxu0 %v710
        %815 = vmatprep.subr.bf16.mxu0 0
        %816 = vmatpush1.bf16.msra.mxu0 %v711
        %817 = vmatprep.subr.bf16.mxu0 0
        %818 = vmatpush1.bf16.msra.mxu0 0
        %819 = vmatprep.subr.bf16.mxu0 0
        %820 = vmatpush1.bf16.msra.mxu0 0
        %821 = vmatprep.subr.bf16.mxu0 0
        %822 = vmatpush1.bf16.msra.mxu0 0
        %823 = vmatprep.subr.bf16.mxu0 0
        %824 = vmatpush1.bf16.msra.mxu0 0
        %825 = vmatprep.subr.bf16.mxu0 0
        %826 = vmatpush1.bf16.msra.mxu0 0
        %827 = vmatprep.subr.bf16.mxu0 0
        %828 = vmatpush1.bf16.msra.mxu0 0
        %829 = vmatprep.subr.bf16.mxu0 0
        %830 = vmatpush1.bf16.msra.mxu0 0
        %831 = vmatprep.subr.bf16.mxu0 0
        %832 = vmatpush1.bf16.msra.mxu0 0
        %833 = vmatprep.mubr.bf16.mxu0 0
        %834 = vmatmul.mubr.bf16.gmra.mrb[0].mxu0 %v570
        %v835 = vpop.f32.mrb[0].mxu0
        %v836 = vadd.f32 %v771, %v835
        %v837 = vpop.f32.mrb[0].mxu0
        %v838 = vpop.f32.mrb[0].mxu0
        %v839 = vadd.f32 %v774, %v838
        %v840 = vpop.f32.mrb[0].mxu0
        %841 = vmatprep.mubr.bf16.mxu0 0
        %842 = vmatmul.mubr.bf16.gmra.mrb[0].mxu0 %v573
        %v843 = vpop.f32.mrb[0].mxu0
        %v844 = vadd.f32 %v779, %v843
        %v845 = vpop.f32.mrb[0].mxu0
        %v846 = vpop.f32.mrb[0].mxu0
        %v847 = vadd.f32 %v782, %v846
        %v848 = vpop.f32.mrb[0].mxu0
        %849 = vmatprep.mubr.bf16.mxu0 0
        %850 = vmatmul.mubr.bf16.gmra.mrb[0].mxu0 %v576
        %v851 = vpop.f32.mrb[0].mxu0
        %v852 = vadd.f32 %v787, %v851
        %v853 = vpop.f32.mrb[0].mxu0
        %v854 = vpop.f32.mrb[0].mxu0
        %v855 = vadd.f32 %v790, %v854
        %v856 = vpop.f32.mrb[0].mxu0
        %857 = vmatprep.mubr.bf16.mxu0 0
        %858 = vmatmul.mubr.bf16.gmra.mrb[0].mxu0 %v579
        %v859 = vpop.f32.mrb[0].mxu0
        %v860 = vadd.f32 %v795, %v859
        %v861 = vpop.f32.mrb[0].mxu0
        %v862 = vpop.f32.mrb[0].mxu0
        %v863 = vadd.f32 %v798, %v862
        %v864 = vpop.f32.mrb[0].mxu0
        %865 = vdwg.mxu0
        %v882 = vunpack.c.l.b16 %v399
        %v883 = vunpack.c.h.b16 %v399
        %v884 = vunpack.c.l.b16 %v400
        %v885 = vunpack.c.l.b16 %v401
        %v886 = vunpack.c.h.b16 %v401
        %v887 = vunpack.c.l.b16 %v402
        %v888 = vunpack.c.l.b16 %v403
        %v889 = vunpack.c.h.b16 %v403
        %v890 = vunpack.c.l.b16 %v404
        %v891 = vunpack.c.l.b16 %v405
        %v892 = vunpack.c.h.b16 %v405
        %v893 = vunpack.c.l.b16 %v406
        %v894 = vunpack.c.l.b16 %v407
        %v895 = vunpack.c.h.b16 %v407
        %v896 = vunpack.c.l.b16 %v408
        %v897 = vunpack.c.l.b16 %v409
        %v898 = vunpack.c.h.b16 %v409
        %v899 = vunpack.c.l.b16 %v410
        %v900 = vunpack.c.l.b16 %v411
        %v901 = vunpack.c.h.b16 %v411
        %v902 = vunpack.c.l.b16 %v412
        %v903 = vunpack.c.l.b16 %v413
        %v904 = vunpack.c.h.b16 %v413
        %v905 = vunpack.c.l.b16 %v414
        %v906 = vpack.c.b16 %v885, %v882
        %v907 = vpack.c.b16 %v886, %v883
        %v908 = vpack.c.b16 %v887, %v884
        %v909 = vpack.c.b16 %v891, %v888
        %v910 = vpack.c.b16 %v892, %v889
        %v911 = vpack.c.b16 %v893, %v890
        %v912 = vpack.c.b16 %v897, %v894
        %v913 = vpack.c.b16 %v898, %v895
        %v914 = vpack.c.b16 %v899, %v896
        %v915 = vpack.c.b16 %v903, %v900
        %v916 = vpack.c.b16 %v904, %v901
        %v917 = vpack.c.b16 %v905, %v902
        %v978 = vunpack.c.l.b16 %v415
        %v979 = vunpack.c.l.b16 %v416
        %v980 = vunpack.c.l.b16 %v417
        %v981 = vunpack.c.l.b16 %v418
        %v982 = vunpack.c.l.b16 %v419
        %v983 = vunpack.c.l.b16 %v420
        %v984 = vunpack.c.l.b16 %v421
        %v985 = vunpack.c.l.b16 %v422
        %v986 = vunpack.c.l.b16 %v423
        %v987 = vunpack.c.l.b16 %v424
        %v988 = vunpack.c.l.b16 %v425
        %v989 = vunpack.c.l.b16 %v426
        %v990 = vunpack.c.l.b16 %v427
        %v991 = vunpack.c.l.b16 %v428
        %v992 = vunpack.c.l.b16 %v429
        %v993 = vunpack.c.l.b16 %v430
        %v994 = vunpack.c.l.b16 %v431
        %v995 = vunpack.c.l.b16 %v432
        %v996 = vunpack.c.l.b16 %v433
        %v997 = vunpack.c.l.b16 %v434
        %v998 = vunpack.c.l.b16 %v435
        %v999 = vunpack.c.l.b16 %v436
        %v1000 = vunpack.c.l.b16 %v437
        %v1001 = vunpack.c.l.b16 %v438
        %v1002 = vunpack.c.l.b16 %v439
        %v1003 = vunpack.c.l.b16 %v440
        %v1004 = vunpack.c.l.b16 %v441
        %v1005 = vunpack.c.l.b16 %v442
        %v1006 = vunpack.c.l.b16 %v443
        %v1007 = vunpack.c.l.b16 %v444
        %v1008 = vunpack.c.l.b16 %v445
        %v1009 = vunpack.c.l.b16 %v446
        %v1010 = vunpack.c.l.b16 %v447
        %v1011 = vunpack.c.l.b16 %v448
        %v1012 = vunpack.c.l.b16 %v449
        %v1013 = vunpack.c.l.b16 %v450
        %v1014 = vunpack.c.l.b16 %v451
        %v1015 = vunpack.c.l.b16 %v452
        %v1016 = vunpack.c.l.b16 %v453
        %v1017 = vunpack.c.l.b16 %v454
        %v1018 = vunpack.c.l.b16 %v455
        %v1019 = vunpack.c.l.b16 %v456
        %v1020 = vunpack.c.l.b16 %v457
        %v1021 = vunpack.c.l.b16 %v458
        %v1022 = vunpack.c.l.b16 %v459
        %v1023 = vunpack.c.l.b16 %v460
        %v1024 = vunpack.c.l.b16 %v461
        %v1025 = vunpack.c.l.b16 %v462
        %v1026 = vpack.c.b16 %v979, %v978
        %v1027 = vpack.c.b16 %v981, %v980
        %v1028 = vpack.c.b16 %v983, %v982
        %v1029 = vpack.c.b16 %v985, %v984
        %v1030 = vpack.c.b16 %v987, %v986
        %v1031 = vpack.c.b16 %v989, %v988
        %v1032 = vpack.c.b16 %v991, %v990
        %v1033 = vpack.c.b16 %v993, %v992
        %v1034 = vpack.c.b16 %v995, %v994
        %v1035 = vpack.c.b16 %v997, %v996
        %v1036 = vpack.c.b16 %v999, %v998
        %v1037 = vpack.c.b16 %v1001, %v1000
        %v1038 = vpack.c.b16 %v1003, %v1002
        %v1039 = vpack.c.b16 %v1005, %v1004
        %v1040 = vpack.c.b16 %v1007, %v1006
        %v1041 = vpack.c.b16 %v1009, %v1008
        %v1042 = vpack.c.b16 %v1011, %v1010
        %v1043 = vpack.c.b16 %v1013, %v1012
        %v1044 = vpack.c.b16 %v1015, %v1014
        %v1045 = vpack.c.b16 %v1017, %v1016
        %v1046 = vpack.c.b16 %v1019, %v1018
        %v1047 = vpack.c.b16 %v1021, %v1020
        %v1048 = vpack.c.b16 %v1023, %v1022
        %v1049 = vpack.c.b16 %v1025, %v1024
        %1074 = vmatprep.subr.bf16.mxu0 0
        %1075 = vmatpush1.bf16.msra.mxu0 %v1026
        %1076 = vmatprep.subr.bf16.mxu0 0
        %1077 = vmatpush1.bf16.msra.mxu0 %v1027
        %1078 = vmatprep.subr.bf16.mxu0 0
        %1079 = vmatpush1.bf16.msra.mxu0 %v1028
        %1080 = vmatprep.subr.bf16.mxu0 0
        %1081 = vmatpush1.bf16.msra.mxu0 %v1029
        %1082 = vmatprep.subr.bf16.mxu0 0
        %1083 = vmatpush1.bf16.msra.mxu0 %v1030
        %1084 = vmatprep.subr.bf16.mxu0 0
        %1085 = vmatpush1.bf16.msra.mxu0 %v1031
        %1086 = vmatprep.subr.bf16.mxu0 0
        %1087 = vmatpush1.bf16.msra.mxu0 %v1032
        %1088 = vmatprep.subr.bf16.mxu0 0
        %1089 = vmatpush1.bf16.msra.mxu0 %v1033
        %1090 = vmatprep.subr.bf16.mxu0 0
        %1091 = vmatpush1.bf16.msra.mxu0 %v1034
        %1092 = vmatprep.subr.bf16.mxu0 0
        %1093 = vmatpush1.bf16.msra.mxu0 %v1035
        %1094 = vmatprep.subr.bf16.mxu0 0
        %1095 = vmatpush1.bf16.msra.mxu0 %v1036
        %1096 = vmatprep.subr.bf16.mxu0 0
        %1097 = vmatpush1.bf16.msra.mxu0 %v1037
        %1098 = vmatprep.subr.bf16.mxu0 0
        %1099 = vmatpush1.bf16.msra.mxu0 %v1038
        %1100 = vmatprep.subr.bf16.mxu0 0
        %1101 = vmatpush1.bf16.msra.mxu0 %v1039
        %1102 = vmatprep.subr.bf16.mxu0 0
        %1103 = vmatpush1.bf16.msra.mxu0 %v1040
        %1104 = vmatprep.subr.bf16.mxu0 0
        %1105 = vmatpush1.bf16.msra.mxu0 %v1041
        %1106 = vmatprep.mubr.bf16.mxu0 %v907
        %1107 = vmatmul.mubr.bf16.gmra.mrb[0].mxu0 %v906
        %v1108 = vpop.f32.mrb[0].mxu0
        %v1109 = vadd.f32 %v836, %v1108
        %v1110 = vpop.f32.mrb[0].mxu0
        %v1111 = vpop.f32.mrb[0].mxu0
        %v1112 = vadd.f32 %v839, %v1111
        %v1113 = vpop.f32.mrb[0].mxu0
        %1114 = vmatprep.mubr.bf16.mxu0 %v910
        %1115 = vmatmul.mubr.bf16.gmra.mrb[0].mxu0 %v909
        %v1116 = vpop.f32.mrb[0].mxu0
        %v1117 = vadd.f32 %v844, %v1116
        %v1118 = vpop.f32.mrb[0].mxu0
        %v1119 = vpop.f32.mrb[0].mxu0
        %v1120 = vadd.f32 %v847, %v1119
        %v1121 = vpop.f32.mrb[0].mxu0
        %1122 = vmatprep.mubr.bf16.mxu0 %v913
        %1123 = vmatmul.mubr.bf16.gmra.mrb[0].mxu0 %v912
        %v1124 = vpop.f32.mrb[0].mxu0
        %v1125 = vadd.f32 %v852, %v1124
        %v1126 = vpop.f32.mrb[0].mxu0
        %v1127 = vpop.f32.mrb[0].mxu0
        %v1128 = vadd.f32 %v855, %v1127
        %v1129 = vpop.f32.mrb[0].mxu0
        %1130 = vmatprep.mubr.bf16.mxu0 %v916
        %1131 = vmatmul.mubr.bf16.gmra.mrb[0].mxu0 %v915
        %v1132 = vpop.f32.mrb[0].mxu0
        %v1133 = vadd.f32 %v860, %v1132
        %v1134 = vpop.f32.mrb[0].mxu0
        %v1135 = vpop.f32.mrb[0].mxu0
        %v1136 = vadd.f32 %v863, %v1135
        %v1137 = vpop.f32.mrb[0].mxu0
        %1138 = vdwg.mxu0
        %1139 = vmatprep.subr.bf16.mxu0 0
        %1140 = vmatpush1.bf16.msra.mxu0 %v1042
        %1141 = vmatprep.subr.bf16.mxu0 0
        %1142 = vmatpush1.bf16.msra.mxu0 %v1043
        %1143 = vmatprep.subr.bf16.mxu0 0
        %1144 = vmatpush1.bf16.msra.mxu0 %v1044
        %1145 = vmatprep.subr.bf16.mxu0 0
        %1146 = vmatpush1.bf16.msra.mxu0 %v1045
        %1147 = vmatprep.subr.bf16.mxu0 0
        %1148 = vmatpush1.bf16.msra.mxu0 %v1046
        %1149 = vmatprep.subr.bf16.mxu0 0
        %1150 = vmatpush1.bf16.msra.mxu0 %v1047
        %1151 = vmatprep.subr.bf16.mxu0 0
        %1152 = vmatpush1.bf16.msra.mxu0 %v1048
        %1153 = vmatprep.subr.bf16.mxu0 0
        %1154 = vmatpush1.bf16.msra.mxu0 %v1049
        %1155 = vmatprep.subr.bf16.mxu0 0
        %1156 = vmatpush1.bf16.msra.mxu0 0
        %1157 = vmatprep.subr.bf16.mxu0 0
        %1158 = vmatpush1.bf16.msra.mxu0 0
        %1159 = vmatprep.subr.bf16.mxu0 0
        %1160 = vmatpush1.bf16.msra.mxu0 0
        %1161 = vmatprep.subr.bf16.mxu0 0
        %1162 = vmatpush1.bf16.msra.mxu0 0
        %1163 = vmatprep.subr.bf16.mxu0 0
        %1164 = vmatpush1.bf16.msra.mxu0 0
        %1165 = vmatprep.subr.bf16.mxu0 0
        %1166 = vmatpush1.bf16.msra.mxu0 0
        %1167 = vmatprep.subr.bf16.mxu0 0
        %1168 = vmatpush1.bf16.msra.mxu0 0
        %1169 = vmatprep.subr.bf16.mxu0 0
        %1170 = vmatpush1.bf16.msra.mxu0 0
        %1171 = vmatprep.mubr.bf16.mxu0 0
        %1172 = vmatmul.mubr.bf16.gmra.mrb[0].mxu0 %v908
        %v1173 = vpop.f32.mrb[0].mxu0
        %v1174 = vadd.f32 %v1109, %v1173
        %v1175 = vpop.f32.mrb[0].mxu0
        %v1176 = vpop.f32.mrb[0].mxu0
        %v1177 = vadd.f32 %v1112, %v1176
        %v1178 = vpop.f32.mrb[0].mxu0
        %1179 = vmatprep.mubr.bf16.mxu0 0
        %1180 = vmatmul.mubr.bf16.gmra.mrb[0].mxu0 %v911
        %v1181 = vpop.f32.mrb[0].mxu0
        %v1182 = vadd.f32 %v1117, %v1181
        %v1183 = vpop.f32.mrb[0].mxu0
        %v1184 = vpop.f32.mrb[0].mxu0
        %v1185 = vadd.f32 %v1120, %v1184
        %v1186 = vpop.f32.mrb[0].mxu0
        %1187 = vmatprep.mubr.bf16.mxu0 0
        %1188 = vmatmul.mubr.bf16.gmra.mrb[0].mxu0 %v914
        %v1189 = vpop.f32.mrb[0].mxu0
        %v1190 = vadd.f32 %v1125, %v1189
        %v1191 = vpop.f32.mrb[0].mxu0
        %v1192 = vpop.f32.mrb[0].mxu0
        %v1193 = vadd.f32 %v1128, %v1192
        %v1194 = vpop.f32.mrb[0].mxu0
        %1195 = vmatprep.mubr.bf16.mxu0 0
        %1196 = vmatmul.mubr.bf16.gmra.mrb[0].mxu0 %v917
        %v1197 = vpop.f32.mrb[0].mxu0
        %v1198 = vadd.f32 %v1133, %v1197
        %v1199 = vpop.f32.mrb[0].mxu0
        %v1200 = vpop.f32.mrb[0].mxu0
        %v1201 = vadd.f32 %v1136, %v1200
        %v1202 = vpop.f32.mrb[0].mxu0
        %1203 = vdwg.mxu0
        %v1204 = vld [vmem:[%s347] sm:$0xff]
        %v1205 = vld [vmem:[%s347 + $0x8] sm:$0xf]
        %v1206 = vld [vmem:[%s347 + $0xc] sm:$0xff]
        %v1207 = vld [vmem:[%s347 + $0x14] sm:$0xf]
        %v1208 = vld [vmem:[%s347 + $0x18] sm:$0xff]
        %v1209 = vld [vmem:[%s347 + $0x20] sm:$0xf]
        %v1210 = vld [vmem:[%s347 + $0x24] sm:$0xff]
        %v1211 = vld [vmem:[%s347 + $0x2c] sm:$0xf]
        %v1212 = vld [vmem:[%s347 + $0x30] sm:$0xff]
        %v1213 = vld [vmem:[%s347 + $0x38] sm:$0xf]
        %v1214 = vld [vmem:[%s347 + $0x3c] sm:$0xff]
        %v1215 = vld [vmem:[%s347 + $0x44] sm:$0xf]
        %v1216 = vld [vmem:[%s347 + $0x48] sm:$0xff]
        %v1217 = vld [vmem:[%s347 + $0x50] sm:$0xf]
        %v1218 = vld [vmem:[%s347 + $0x54] sm:$0xff]
        %v1219 = vld [vmem:[%s347 + $0x5c] sm:$0xf]
        %s1220 = scalar_lea.vmem [#allocation8], 384
        %v1221 = vld [vmem:[%s1220] sm:$0xf]
        %v1222 = vld [vmem:[%s1220 + $0x4] sm:$0xf]
        %v1223 = vld [vmem:[%s1220 + $0x8] sm:$0xf]
        %v1224 = vld [vmem:[%s1220 + $0xc] sm:$0xf]
        %v1225 = vld [vmem:[%s1220 + $0x10] sm:$0xf]
        %v1226 = vld [vmem:[%s1220 + $0x14] sm:$0xf]
        %v1227 = vld [vmem:[%s1220 + $0x18] sm:$0xf]
        %v1228 = vld [vmem:[%s1220 + $0x1c] sm:$0xf]
        %v1229 = vld [vmem:[%s1220 + $0x20] sm:$0xf]
        %v1230 = vld [vmem:[%s1220 + $0x24] sm:$0xf]
        %v1231 = vld [vmem:[%s1220 + $0x28] sm:$0xf]
        %v1232 = vld [vmem:[%s1220 + $0x2c] sm:$0xf]
        %v1233 = vld [vmem:[%s1220 + $0x30] sm:$0xf]
        %v1234 = vld [vmem:[%s1220 + $0x34] sm:$0xf]
        %v1235 = vld [vmem:[%s1220 + $0x38] sm:$0xf]
        %v1236 = vld [vmem:[%s1220 + $0x3c] sm:$0xf]
        %v1237 = vld [vmem:[%s1220 + $0x40] sm:$0xf]
        %v1238 = vld [vmem:[%s1220 + $0x44] sm:$0xf]
        %v1239 = vld [vmem:[%s1220 + $0x48] sm:$0xf]
        %v1240 = vld [vmem:[%s1220 + $0x4c] sm:$0xf]
        %v1241 = vld [vmem:[%s1220 + $0x50] sm:$0xf]
        %v1242 = vld [vmem:[%s1220 + $0x54] sm:$0xf]
        %v1243 = vld [vmem:[%s1220 + $0x58] sm:$0xf]
        %v1244 = vld [vmem:[%s1220 + $0x5c] sm:$0xf]
        %v1245 = vld [vmem:[%s1220 + $0x60] sm:$0xf]
        %v1246 = vld [vmem:[%s1220 + $0x64] sm:$0xf]
        %v1247 = vld [vmem:[%s1220 + $0x68] sm:$0xf]
        %v1248 = vld [vmem:[%s1220 + $0x6c] sm:$0xf]
        %v1249 = vld [vmem:[%s1220 + $0x70] sm:$0xf]
        %v1250 = vld [vmem:[%s1220 + $0x74] sm:$0xf]
        %v1251 = vld [vmem:[%s1220 + $0x78] sm:$0xf]
        %v1252 = vld [vmem:[%s1220 + $0x7c] sm:$0xf]
        %v1253 = vld [vmem:[%s1220 + $0x80] sm:$0xf]
        %v1254 = vld [vmem:[%s1220 + $0x84] sm:$0xf]
        %v1255 = vld [vmem:[%s1220 + $0x88] sm:$0xf]
        %v1256 = vld [vmem:[%s1220 + $0x8c] sm:$0xf]
        %v1257 = vld [vmem:[%s1220 + $0x90] sm:$0xf]
        %v1258 = vld [vmem:[%s1220 + $0x94] sm:$0xf]
        %v1259 = vld [vmem:[%s1220 + $0x98] sm:$0xf]
        %v1260 = vld [vmem:[%s1220 + $0x9c] sm:$0xf]
        %v1261 = vld [vmem:[%s1220 + $0xa0] sm:$0xf]
        %v1262 = vld [vmem:[%s1220 + $0xa4] sm:$0xf]
        %v1263 = vld [vmem:[%s1220 + $0xa8] sm:$0xf]
        %v1264 = vld [vmem:[%s1220 + $0xac] sm:$0xf]
        %v1265 = vld [vmem:[%s1220 + $0xb0] sm:$0xf]
        %v1266 = vld [vmem:[%s1220 + $0xb4] sm:$0xf]
        %v1267 = vld [vmem:[%s1220 + $0xb8] sm:$0xf]
        %v1268 = vld [vmem:[%s1220 + $0xbc] sm:$0xf]
        %v1285 = vunpack.c.l.b16 %v1204
        %v1286 = vunpack.c.h.b16 %v1204
        %v1287 = vunpack.c.l.b16 %v1205
        %v1288 = vunpack.c.l.b16 %v1206
        %v1289 = vunpack.c.h.b16 %v1206
        %v1290 = vunpack.c.l.b16 %v1207
        %v1291 = vunpack.c.l.b16 %v1208
        %v1292 = vunpack.c.h.b16 %v1208
        %v1293 = vunpack.c.l.b16 %v1209
        %v1294 = vunpack.c.l.b16 %v1210
        %v1295 = vunpack.c.h.b16 %v1210
        %v1296 = vunpack.c.l.b16 %v1211
        %v1297 = vunpack.c.l.b16 %v1212
        %v1298 = vunpack.c.h.b16 %v1212
        %v1299 = vunpack.c.l.b16 %v1213
        %v1300 = vunpack.c.l.b16 %v1214
        %v1301 = vunpack.c.h.b16 %v1214
        %v1302 = vunpack.c.l.b16 %v1215
        %v1303 = vunpack.c.l.b16 %v1216
        %v1304 = vunpack.c.h.b16 %v1216
        %v1305 = vunpack.c.l.b16 %v1217
        %v1306 = vunpack.c.l.b16 %v1218
        %v1307 = vunpack.c.h.b16 %v1218
        %v1308 = vunpack.c.l.b16 %v1219
        %v1309 = vpack.c.b16 %v1288, %v1285
        %v1310 = vpack.c.b16 %v1289, %v1286
        %v1311 = vpack.c.b16 %v1290, %v1287
        %v1312 = vpack.c.b16 %v1294, %v1291
        %v1313 = vpack.c.b16 %v1295, %v1292
        %v1314 = vpack.c.b16 %v1296, %v1293
        %v1315 = vpack.c.b16 %v1300, %v1297
        %v1316 = vpack.c.b16 %v1301, %v1298
        %v1317 = vpack.c.b16 %v1302, %v1299
        %v1318 = vpack.c.b16 %v1306, %v1303
        %v1319 = vpack.c.b16 %v1307, %v1304
        %v1320 = vpack.c.b16 %v1308, %v1305
        %v1381 = vunpack.c.l.b16 %v1221
        %v1382 = vunpack.c.l.b16 %v1222
        %v1383 = vunpack.c.l.b16 %v1223
        %v1384 = vunpack.c.l.b16 %v1224
        %v1385 = vunpack.c.l.b16 %v1225
        %v1386 = vunpack.c.l.b16 %v1226
        %v1387 = vunpack.c.l.b16 %v1227
        %v1388 = vunpack.c.l.b16 %v1228
        %v1389 = vunpack.c.l.b16 %v1229
        %v1390 = vunpack.c.l.b16 %v1230
        %v1391 = vunpack.c.l.b16 %v1231
        %v1392 = vunpack.c.l.b16 %v1232
        %v1393 = vunpack.c.l.b16 %v1233
        %v1394 = vunpack.c.l.b16 %v1234
        %v1395 = vunpack.c.l.b16 %v1235
        %v1396 = vunpack.c.l.b16 %v1236
        %v1397 = vunpack.c.l.b16 %v1237
        %v1398 = vunpack.c.l.b16 %v1238
        %v1399 = vunpack.c.l.b16 %v1239
        %v1400 = vunpack.c.l.b16 %v1240
        %v1401 = vunpack.c.l.b16 %v1241
        %v1402 = vunpack.c.l.b16 %v1242
        %v1403 = vunpack.c.l.b16 %v1243
        %v1404 = vunpack.c.l.b16 %v1244
        %v1405 = vunpack.c.l.b16 %v1245
        %v1406 = vunpack.c.l.b16 %v1246
        %v1407 = vunpack.c.l.b16 %v1247
        %v1408 = vunpack.c.l.b16 %v1248
        %v1409 = vunpack.c.l.b16 %v1249
        %v1410 = vunpack.c.l.b16 %v1250
        %v1411 = vunpack.c.l.b16 %v1251
        %v1412 = vunpack.c.l.b16 %v1252
        %v1413 = vunpack.c.l.b16 %v1253
        %v1414 = vunpack.c.l.b16 %v1254
        %v1415 = vunpack.c.l.b16 %v1255
        %v1416 = vunpack.c.l.b16 %v1256
        %v1417 = vunpack.c.l.b16 %v1257
        %v1418 = vunpack.c.l.b16 %v1258
        %v1419 = vunpack.c.l.b16 %v1259
        %v1420 = vunpack.c.l.b16 %v1260
        %v1421 = vunpack.c.l.b16 %v1261
        %v1422 = vunpack.c.l.b16 %v1262
        %v1423 = vunpack.c.l.b16 %v1263
        %v1424 = vunpack.c.l.b16 %v1264
        %v1425 = vunpack.c.l.b16 %v1265
        %v1426 = vunpack.c.l.b16 %v1266
        %v1427 = vunpack.c.l.b16 %v1267
        %v1428 = vunpack.c.l.b16 %v1268
        %v1429 = vpack.c.b16 %v1382, %v1381
        %v1430 = vpack.c.b16 %v1384, %v1383
        %v1431 = vpack.c.b16 %v1386, %v1385
        %v1432 = vpack.c.b16 %v1388, %v1387
        %v1433 = vpack.c.b16 %v1390, %v1389
        %v1434 = vpack.c.b16 %v1392, %v1391
        %v1435 = vpack.c.b16 %v1394, %v1393
        %v1436 = vpack.c.b16 %v1396, %v1395
        %v1437 = vpack.c.b16 %v1398, %v1397
        %v1438 = vpack.c.b16 %v1400, %v1399
        %v1439 = vpack.c.b16 %v1402, %v1401
        %v1440 = vpack.c.b16 %v1404, %v1403
        %v1441 = vpack.c.b16 %v1406, %v1405
        %v1442 = vpack.c.b16 %v1408, %v1407
        %v1443 = vpack.c.b16 %v1410, %v1409
        %v1444 = vpack.c.b16 %v1412, %v1411
        %v1445 = vpack.c.b16 %v1414, %v1413
        %v1446 = vpack.c.b16 %v1416, %v1415
        %v1447 = vpack.c.b16 %v1418, %v1417
        %v1448 = vpack.c.b16 %v1420, %v1419
        %v1449 = vpack.c.b16 %v1422, %v1421
        %v1450 = vpack.c.b16 %v1424, %v1423
        %v1451 = vpack.c.b16 %v1426, %v1425
        %v1452 = vpack.c.b16 %v1428, %v1427
        %1477 = vmatprep.subr.bf16.mxu0 0
        %1478 = vmatpush1.bf16.msra.mxu0 %v1429
        %1479 = vmatprep.subr.bf16.mxu0 0
        %1480 = vmatpush1.bf16.msra.mxu0 %v1430
        %1481 = vmatprep.subr.bf16.mxu0 0
        %1482 = vmatpush1.bf16.msra.mxu0 %v1431
        %1483 = vmatprep.subr.bf16.mxu0 0
        %1484 = vmatpush1.bf16.msra.mxu0 %v1432
        %1485 = vmatprep.subr.bf16.mxu0 0
        %1486 = vmatpush1.bf16.msra.mxu0 %v1433
        %1487 = vmatprep.subr.bf16.mxu0 0
        %1488 = vmatpush1.bf16.msra.mxu0 %v1434
        %1489 = vmatprep.subr.bf16.mxu0 0
        %1490 = vmatpush1.bf16.msra.mxu0 %v1435
        %1491 = vmatprep.subr.bf16.mxu0 0
        %1492 = vmatpush1.bf16.msra.mxu0 %v1436
        %1493 = vmatprep.subr.bf16.mxu0 0
        %1494 = vmatpush1.bf16.msra.mxu0 %v1437
        %1495 = vmatprep.subr.bf16.mxu0 0
        %1496 = vmatpush1.bf16.msra.mxu0 %v1438
        %1497 = vmatprep.subr.bf16.mxu0 0
        %1498 = vmatpush1.bf16.msra.mxu0 %v1439
        %1499 = vmatprep.subr.bf16.mxu0 0
        %1500 = vmatpush1.bf16.msra.mxu0 %v1440
        %1501 = vmatprep.subr.bf16.mxu0 0
        %1502 = vmatpush1.bf16.msra.mxu0 %v1441
        %1503 = vmatprep.subr.bf16.mxu0 0
        %1504 = vmatpush1.bf16.msra.mxu0 %v1442
        %1505 = vmatprep.subr.bf16.mxu0 0
        %1506 = vmatpush1.bf16.msra.mxu0 %v1443
        %1507 = vmatprep.subr.bf16.mxu0 0
        %1508 = vmatpush1.bf16.msra.mxu0 %v1444
        %1509 = vmatprep.mubr.bf16.mxu0 %v1310
        %1510 = vmatmul.mubr.bf16.gmra.mrb[0].mxu0 %v1309
        %v1511 = vpop.f32.mrb[0].mxu0
        %v1512 = vadd.f32 0.0, %v1511
        %v1513 = vpop.f32.mrb[0].mxu0
        %v1514 = vpop.f32.mrb[0].mxu0
        %v1515 = vadd.f32 0.0, %v1514
        %v1516 = vpop.f32.mrb[0].mxu0
        %1517 = vmatprep.mubr.bf16.mxu0 %v1313
        %1518 = vmatmul.mubr.bf16.gmra.mrb[0].mxu0 %v1312
        %v1519 = vpop.f32.mrb[0].mxu0
        %v1520 = vadd.f32 0.0, %v1519
        %v1521 = vpop.f32.mrb[0].mxu0
        %v1522 = vpop.f32.mrb[0].mxu0
        %v1523 = vadd.f32 0.0, %v1522
        %v1524 = vpop.f32.mrb[0].mxu0
        %1525 = vmatprep.mubr.bf16.mxu0 %v1316
        %1526 = vmatmul.mubr.bf16.gmra.mrb[0].mxu0 %v1315
        %v1527 = vpop.f32.mrb[0].mxu0
        %v1528 = vadd.f32 0.0, %v1527
        %v1529 = vpop.f32.mrb[0].mxu0
        %v1530 = vpop.f32.mrb[0].mxu0
        %v1531 = vadd.f32 0.0, %v1530
        %v1532 = vpop.f32.mrb[0].mxu0
        %1533 = vmatprep.mubr.bf16.mxu0 %v1319
        %1534 = vmatmul.mubr.bf16.gmra.mrb[0].mxu0 %v1318
        %v1535 = vpop.f32.mrb[0].mxu0
        %v1536 = vadd.f32 0.0, %v1535
        %v1537 = vpop.f32.mrb[0].mxu0
        %v1538 = vpop.f32.mrb[0].mxu0
        %v1539 = vadd.f32 0.0, %v1538
        %v1540 = vpop.f32.mrb[0].mxu0
        %1541 = vdwg.mxu0
        %1542 = vmatprep.subr.bf16.mxu0 0
        %1543 = vmatpush1.bf16.msra.mxu0 %v1445
        %1544 = vmatprep.subr.bf16.mxu0 0
        %1545 = vmatpush1.bf16.msra.mxu0 %v1446
        %1546 = vmatprep.subr.bf16.mxu0 0
        %1547 = vmatpush1.bf16.msra.mxu0 %v1447
        %1548 = vmatprep.subr.bf16.mxu0 0
        %1549 = vmatpush1.bf16.msra.mxu0 %v1448
        %1550 = vmatprep.subr.bf16.mxu0 0
        %1551 = vmatpush1.bf16.msra.mxu0 %v1449
        %1552 = vmatprep.subr.bf16.mxu0 0
        %1553 = vmatpush1.bf16.msra.mxu0 %v1450
        %1554 = vmatprep.subr.bf16.mxu0 0
        %1555 = vmatpush1.bf16.msra.mxu0 %v1451
        %1556 = vmatprep.subr.bf16.mxu0 0
        %1557 = vmatpush1.bf16.msra.mxu0 %v1452
        %1558 = vmatprep.subr.bf16.mxu0 0
        %1559 = vmatpush1.bf16.msra.mxu0 0
        %1560 = vmatprep.subr.bf16.mxu0 0
        %1561 = vmatpush1.bf16.msra.mxu0 0
        %1562 = vmatprep.subr.bf16.mxu0 0
        %1563 = vmatpush1.bf16.msra.mxu0 0
        %1564 = vmatprep.subr.bf16.mxu0 0
        %1565 = vmatpush1.bf16.msra.mxu0 0
        %1566 = vmatprep.subr.bf16.mxu0 0
        %1567 = vmatpush1.bf16.msra.mxu0 0
        %1568 = vmatprep.subr.bf16.mxu0 0
        %1569 = vmatpush1.bf16.msra.mxu0 0
        %1570 = vmatprep.subr.bf16.mxu0 0
        %1571 = vmatpush1.bf16.msra.mxu0 0
        %1572 = vmatprep.subr.bf16.mxu0 0
        %1573 = vmatpush1.bf16.msra.mxu0 0
        %1574 = vmatprep.mubr.bf16.mxu0 0
        %1575 = vmatmul.mubr.bf16.gmra.mrb[0].mxu0 %v1311
        %v1576 = vpop.f32.mrb[0].mxu0
        %v1577 = vadd.f32 %v1512, %v1576
        %v1578 = vpop.f32.mrb[0].mxu0
        %v1579 = vpop.f32.mrb[0].mxu0
        %v1580 = vadd.f32 %v1515, %v1579
        %v1581 = vpop.f32.mrb[0].mxu0
        %1582 = vmatprep.mubr.bf16.mxu0 0
        %1583 = vmatmul.mubr.bf16.gmra.mrb[0].mxu0 %v1314
        %v1584 = vpop.f32.mrb[0].mxu0
        %v1585 = vadd.f32 %v1520, %v1584
        %v1586 = vpop.f32.mrb[0].mxu0
        %v1587 = vpop.f32.mrb[0].mxu0
        %v1588 = vadd.f32 %v1523, %v1587
        %v1589 = vpop.f32.mrb[0].mxu0
        %1590 = vmatprep.mubr.bf16.mxu0 0
        %1591 = vmatmul.mubr.bf16.gmra.mrb[0].mxu0 %v1317
        %v1592 = vpop.f32.mrb[0].mxu0
        %v1593 = vadd.f32 %v1528, %v1592
        %v1594 = vpop.f32.mrb[0].mxu0
        %v1595 = vpop.f32.mrb[0].mxu0
        %v1596 = vadd.f32 %v1531, %v1595
        %v1597 = vpop.f32.mrb[0].mxu0
        %1598 = vmatprep.mubr.bf16.mxu0 0
        %1599 = vmatmul.mubr.bf16.gmra.mrb[0].mxu0 %v1320
        %v1600 = vpop.f32.mrb[0].mxu0
        %v1601 = vadd.f32 %v1536, %v1600
        %v1602 = vpop.f32.mrb[0].mxu0
        %v1603 = vpop.f32.mrb[0].mxu0
        %v1604 = vadd.f32 %v1539, %v1603
        %v1605 = vpop.f32.mrb[0].mxu0
        %1606 = vdwg.mxu0
        %v1607 = vadd.f32 %v1174, %v1577
        %v1608 = vadd.f32 %v1177, %v1580
        %v1609 = vadd.f32 %v1182, %v1585
        %v1610 = vadd.f32 %v1185, %v1588
        %v1611 = vadd.f32 %v1190, %v1593
        %v1612 = vadd.f32 %v1193, %v1596
        %v1613 = vadd.f32 %v1198, %v1601
        %v1614 = vadd.f32 %v1201, %v1604
        %v1615 = vld [vmem:[%s396] sm:$0x1]
        %v1617 = vlaneseq
        %v1618 = vshrl.u32 %v1617, 7
        %v1619 = vsub.s32 0, %v1618
        %v1620 = vrot.slane %v1615, %v1619
        %v1622 = vadd.f32 %v1607, %v1620
        %v1623 = vadd.f32 %v1608, %v1620
        %v1624 = vadd.f32 %v1609, %v1620
        %v1625 = vadd.f32 %v1610, %v1620
        %v1626 = vadd.f32 %v1611, %v1620
        %v1627 = vadd.f32 %v1612, %v1620
        %v1628 = vadd.f32 %v1613, %v1620
        %v1629 = vadd.f32 %v1614, %v1620
        %v1630 = vpack.c.bf16 %v1623, %v1622
        %v1631 = vpack.c.bf16 %v1625, %v1624
        %v1632 = vpack.c.bf16 %v1627, %v1626
        %v1633 = vpack.c.bf16 %v1629, %v1628
        %v1638 = vunpack.c.l.b16 %v1630
        %v1639 = vunpack.c.h.b16 %v1630
        %v1640 = vunpack.c.l.b16 %v1631
        %v1641 = vunpack.c.h.b16 %v1631
        %v1642 = vunpack.c.l.b16 %v1632
        %v1643 = vunpack.c.h.b16 %v1632
        %v1644 = vunpack.c.l.b16 %v1633
        %v1645 = vunpack.c.h.b16 %v1633
        %v1646 = vpack.c.b16 %v1638, %v1638
        %v1647 = vpack.c.b16 %v1639, %v1639
        %v1648 = vpack.c.b16 %v1640, %v1640
        %v1649 = vpack.c.b16 %v1641, %v1641
        %v1650 = vpack.c.b16 %v1642, %v1642
        %v1651 = vpack.c.b16 %v1643, %v1643
        %v1652 = vpack.c.b16 %v1644, %v1644
        %v1653 = vpack.c.b16 %v1645, %v1645
        %1662 = vst [vmem:[%s390] sm:$0xf] %v1646
        %1663 = vst [vmem:[%s390 + $0x4] sm:$0xf] %v1647
        %1664 = vst [vmem:[%s390 + $0x8] sm:$0xf] %v1648
        %1665 = vst [vmem:[%s390 + $0xc] sm:$0xf] %v1649
        %1666 = vst [vmem:[%s390 + $0x10] sm:$0xf] %v1650
        %1667 = vst [vmem:[%s390 + $0x14] sm:$0xf] %v1651
        %1668 = vst [vmem:[%s390 + $0x18] sm:$0xf] %v1652
        %1669 = vst [vmem:[%s390 + $0x1c] sm:$0xf] %v1653
        %s1670 = sand.u32 %s193, 1
        %s1671 = scalar_lea.sflag [#allocation4], %s1670
        %s1672 = sand.u32 %s193, 1
        %s1673 = smul.addr %s1672, 32
        %s1674 = scalar_lea.vmem [#allocation10], %s1673
        // Predicated region
        $region57: #{tpu_custom_call.1} parent=39 // pred_check
          %p1675 = pneg %p203
        $region58: #{tpu_custom_call.1} parent=39 // pred_check_branch
          %1677 = sbr.rel (%p1675) target = $region60
        $region59: #{tpu_custom_call.1} parent=39 // pred_region
          %s1678 = smul.u32 8, %s32
          %s1680 = ssub.s32 512, 512
          %1681 = vsyncadd %s1671, %s1680
          %s1682 = sadd.s32 %s33, %s1678
          %s1683 = smul.addr %s31, 8
          %s1684 = sadd.s32 %s1682, %s1683
          %s1685 = smul.addr %s1684, 64
          %s1686 = scalar_lea.hbm %s5, %s1685
          %s1687 = sshll.u32 %s1674, 4
          %s1688 = int_to_ptr.vmem [resolvable:$true] %s1687
          %1693 = dma.vmem_to_hbm [thread:$0]  %s1688, 512, %s1686, %s1671, 64, 64, 4
        $region60: #{tpu_custom_call.1} parent=39 // pred_fallthru
          _
      $region40: #{tpu_custom_call.1} parent=5 // pred_fallthru
        _
      %p1694 = scmp.le.s32.totalorder 2, %s21
      // Predicated region
      $region61: #{tpu_custom_call.1} parent=5 // pred_check
        %p1695 = pneg %p1694
      $region62: #{tpu_custom_call.1} parent=5 // pred_check_branch
        %1697 = sbr.rel (%p1695) target = $region64
      $region63: #{tpu_custom_call.1} parent=5 // pred_region
        %s1698 = ssub.s32 %s21, 2
        // Predicated region
        $region65: #{tpu_custom_call.1} parent=63 // pred_check
          %p1699 = pneg %p209
        $region66: #{tpu_custom_call.1} parent=63 // pred_check_branch
          %1701 = sbr.rel (%p1699) target = $region68
        $region67: #{tpu_custom_call.1} parent=63 // pred_region
          %s1702 = sand.u32 %s194, 1
          %s1703 = scalar_lea.sflag [#allocation4], %s1702
          %s1704 = sand.u32 %s194, 1
          %s1705 = smul.addr %s1704, 32
          %s1706 = scalar_lea.vmem [#allocation10], %s1705
          %1707 = dma.done %s1703, 512
        $region68: #{tpu_custom_call.1} parent=63 // pred_fallthru
          _
      $region64: #{tpu_custom_call.1} parent=5 // pred_fallthru
        _
    $region6: #{tpu_custom_call.1} parent=1 // loop_footer
      %s25 = sadd.s32 1, %s21
    $region7: #{tpu_custom_call.1} parent=1 // loop_footer_branch
      %20 = sbr.rel target = $region3
    $region8: #{tpu_custom_call.1} parent=1 // loop_exit
      _
    %1708 = vsyncpa [#allocation3], 1
    %s1709 = scalar_lea.sflag [#allocation3], 1
    %1710 = vsyncpa %s1709, 1
    %1711 = vsyncpa [#allocation6], 1
    %s1712 = scalar_lea.sflag [#allocation6], 1
    %1713 = vsyncpa %s1712, 1
    %1714 = vsyncpa [#allocation9], 1
    %1715 = vsyncpa [#allocation4], 1
    %s1716 = scalar_lea.sflag [#allocation4], 1
    %1717 = vsyncpa %s1716, 1

</llo_original>
